<compile_context>
chip_gen: v5e
topology: v5e:2x2
jax: 0.10.0
libtpu: 0.0.40
codegen_flags: <defaults>
</compile_context>

<pallas_src>
import functools

import jax
import jax.numpy as jnp
import numpy as np
from jax import lax
from jax.experimental import pallas as pl
from jax.experimental.pallas import tpu as pltpu

K = 7                 # conv kernel size
PAD = 3               # conv padding
_STATIC_C_UNROLL = 8  # static channel unroll up to this C, fori_loop beyond


def _spatial_attn_kernel(w_ref, mask_ref, x_ref, o_ref, avg2, max2, *, C, T, V):
    # w_ref   : SMEM (2*K*K,) f32  taps 0..48 = avg taps * (1/C), 49..97 = max
    # mask_ref: VMEM (2*K, TV) f32 rows 0..6 = v-validity per dx,
    #                              rows 7..13 = t-validity per dy
    # x_ref   : VMEM (bt, C, TV)   lane-dense input block
    # o_ref   : VMEM (bt, 1, TV)   lane-dense attention block
    # avg2/max2: VMEM (bt, 2*TV) f32  reduced maps stored twice (self-concat),
    #            so every circular tap shift is one contiguous window load.
    TV = T * V
    bt = o_ref.shape[0]

    # ---- channel reduction on the lane-dense layout ---------------------
    x0 = x_ref[:, 0, :].astype(jnp.float32)
    if C <= _STATIC_C_UNROLL:
        s, m = x0, x0
        for c in range(1, C):
            xc = x_ref[:, c, :].astype(jnp.float32)
            s = s + xc
            m = jnp.maximum(m, xc)
    else:
        def body(c, carry):
            ss, mm = carry
            xc = x_ref[:, c, :].astype(jnp.float32)
            return ss + xc, jnp.maximum(mm, xc)
        s, m = lax.fori_loop(1, C, body, (x0, x0), unroll=4)
    # NOTE: 1/C is folded into the avg conv taps host-side; s is the raw sum.

    # ---- doubled flat maps (fully overwritten -> no zero-fill needed) ---
    avg2[:, 0:TV] = s
    avg2[:, TV:2 * TV] = s
    max2[:, 0:TV] = m
    max2[:, TV:2 * TV] = m

    # ---- hoist all scalar weight reads out of the tap loops -------------
    w_a = [[w_ref[dy * K + dx] for dx in range(K)] for dy in range(K)]
    w_m = [[w_ref[K * K + dy * K + dx] for dx in range(K)] for dy in range(K)]
    vmask = [mask_ref[dx:dx + 1, :] for dx in range(K)]          # (1, TV)
    tmask = [mask_ref[K + dy:K + dy + 1, :] for dy in range(K)]  # (1, TV)

    # ---- 7x7 conv (pad=3) in the flat domain -----------------------------
    # out[i] = sum_{dy,dx} w[dy,dx] * in[i + (dy-3)*V + (dx-3)]   (if valid)
    acc = jnp.zeros((bt, TV), jnp.float32)
    for dy in range(K):
        for dx in range(K):
            off = (dy - PAD) * V + (dx - PAD)
            k = off % TV                              # static python int
            a_sh = avg2[:, pl.ds(k, TV)]              # contiguous window load
            m_sh = max2[:, pl.ds(k, TV)]
            msk = vmask[dx] * tmask[dy]               # (1, TV) validity
            acc = acc + (w_a[dy][dx] * a_sh + w_m[dy][dx] * m_sh) * msk

    # TODO(synk): nn.Dropout is treated as eval-mode identity (no RNG mask).
    o_ref[:, 0, :] = jax.nn.sigmoid(acc).astype(o_ref.dtype)


def _pick_tile_and_vmem(N, C, TV, x_itemsize, out_itemsize):
    """Batch tile (bt) from a per-generation VMEM budget + matching limit."""
    try:
        phys = int(pltpu.get_tpu_info().vmem_capacity_bytes)
    except Exception:
        phys = 64 << 20                        # v7x per-core VMEM (smallest)
    budget = int(phys * 0.45)                  # headroom for compiler scratch
    per_bt = (2 * C * TV * x_itemsize          # double-buffered x block
              + 2 * TV * out_itemsize          # double-buffered out block
              + 2 * 2 * TV * 4)                # two doubled f32 scratch maps
    fixed = 2 * (2 * K) * TV * 4               # mask block
    bt = int(max(1, min(N, (budget - fixed) // per_bt)))
    while N % bt:
        bt -= 1
    # If everything fits in one grid step, split in two only when the halved
    # block is still >= 1 MiB, so 2-TensorCore chips (v7x) get both cores busy
    # without dropping below the per-step-overhead amortization point.
    if N // bt < 2 and bt > 1 and (bt // 2) * C * TV * x_itemsize >= (1 << 20):
        bt2 = bt // 2
        while N % bt2:
            bt2 -= 1
        bt = max(1, bt2)
    vmem_limit = int(min(phys, max(bt * per_bt + fixed + (8 << 20), 32 << 20)))
    return bt, vmem_limit


def spatial_attention(x, conv_w):
    """x: (N, C, T, V); conv_w: (1, 2, 7, 7).

    Returns the compact (N, 1, T, V) attention map in x.dtype.  The module's
    `attention.expand_as(x)` is a zero-copy broadcast view in PyTorch, so the
    channel broadcast is left to the consumer (plain jnp broadcasting).
    """
    N, C, T, V = x.shape
    TV = T * V
    out_dtype = x.dtype

    x_flat = x.reshape(N, C, TV)                       # free: x is contiguous

    # Conv taps, flattened; 1/C folded into the avg-channel taps.
    w = conv_w.astype(jnp.float32)
    w_flat = jnp.concatenate([(w[0, 0] / C).reshape(-1), w[0, 1].reshape(-1)])

    # Tap-validity (zero-padding) masks in the flat domain, factored into
    # 7 v-masks (per dx) and 7 t-masks (per dy).  Host-side numpy constants.
    v_idx = np.arange(TV) % V
    t_idx = np.arange(TV) // V
    vmask = np.stack([(v_idx + dx - PAD >= 0) & (v_idx + dx - PAD < V)
                      for dx in range(K)])
    tmask = np.stack([(t_idx + dy - PAD >= 0) & (t_idx + dy - PAD < T)
                      for dy in range(K)])
    masks = jnp.asarray(np.concatenate([vmask, tmask], 0).astype(np.float32))

    bt, vmem_limit = _pick_tile_and_vmem(
        N, C, TV, x.dtype.itemsize, jnp.dtype(out_dtype).itemsize)

    kernel = functools.partial(_spatial_attn_kernel, C=C, T=T, V=V)

    cost = pl.CostEstimate(
        flops=int(N * TV * (2 * C + 6 * K * K)),
        transcendentals=int(N * TV),
        bytes_accessed=int(N * C * TV * x.dtype.itemsize
                           + N * TV * jnp.dtype(out_dtype).itemsize
                           + masks.size * 4))

    attn = pl.pallas_call(
        kernel,
        out_shape=jax.ShapeDtypeStruct((N, 1, TV), out_dtype),
        grid_spec=pltpu.PrefetchScalarGridSpec(
            num_scalar_prefetch=0,
            grid=(N // bt,),
            in_specs=[
                pl.BlockSpec(memory_space=pltpu.MemorySpace.SMEM),   # taps (98,)
                pl.BlockSpec((2 * K, TV), lambda n: (0, 0)),         # masks
                pl.BlockSpec((bt, C, TV), lambda n: (n, 0, 0)),      # x
            ],
            out_specs=pl.BlockSpec((bt, 1, TV), lambda n: (n, 0, 0)),
            scratch_shapes=[
                pltpu.VMEM((bt, 2 * TV), jnp.float32),   # doubled avg map
                pltpu.VMEM((bt, 2 * TV), jnp.float32),   # doubled max map
            ],
        ),
        compiler_params=pltpu.CompilerParams(
            dimension_semantics=("parallel",),
            vmem_limit_bytes=vmem_limit),
        cost_estimate=cost,
    )(w_flat, masks, x_flat)

    return attn.reshape(N, 1, T, V)


def _reference(x, conv_w):
    avg = jnp.mean(x, axis=1, keepdims=True)
    mx = jnp.max(x, axis=1, keepdims=True)
    comb = jnp.concatenate([avg, mx], axis=1)               # (N, 2, T, V)
    conv = lax.conv_general_dilated(
        comb, conv_w.astype(jnp.float32), window_strides=(1, 1),
        padding=((PAD, PAD), (PAD, PAD)),
        dimension_numbers=("NCHW", "OIHW", "NCHW"))
    attn = jax.nn.sigmoid(conv)
    return jnp.broadcast_to(attn, x.shape)


if __name__ == "__main__":
    key = jax.random.PRNGKey(0)
    kx, kw = jax.random.split(key)

    N, C, T, V = 2, 4, 16, 16
    x = jax.random.normal(kx, (N, C, T, V), dtype=jnp.float32)

    # Deterministic Conv2d(2, 1, 7, bias=False) init (PyTorch-style uniform
    # with bound 1/sqrt(fan_in), fan_in = 2*7*7).
    fan_in = 2 * K * K
    bound = 1.0 / np.sqrt(fan_in)
    conv_w = jax.random.uniform(kw, (1, 2, K, K), jnp.float32, -bound, bound)

    attn = spatial_attention(x, conv_w)          # compact (N, 1, T, V) map
    attn = jax.block_until_ready(attn)

    # Check against reference with the (lazy) expand_as broadcast applied.
    out_full = jnp.broadcast_to(attn, (N, C, T, V))
    ref = _reference(x, conv_w)
    assert attn.shape == (N, 1, T, V)
    assert out_full.shape == (N, C, T, V)
    np.testing.assert_allclose(np.asarray(out_full), np.asarray(ref),
                               atol=1e-5, rtol=1e-5)
    print("KERNEL_OK")
</pallas_src>

<mosaic_0001>
module attributes {stable_mosaic.version = 11 : i64} {
  func.func @_spatial_attn_kernel(%arg0: i32, %arg1: memref<98xf32, #tpu.memory_space<smem>>, %arg2: memref<14x256xf32, #tpu.memory_space<vmem>>, %arg3: memref<2x4x256xf32, #tpu.memory_space<vmem>>, %arg4: memref<2x1x256xf32, #tpu.memory_space<vmem>>, %arg5: memref<2x512xf32, #tpu.memory_space<vmem>>, %arg6: memref<2x512xf32, #tpu.memory_space<vmem>>) attributes {dimension_semantics = [#tpu.dimension_semantics<parallel>], iteration_bounds = array<i64: 1>, scalar_prefetch = 0 : i64, scratch_operands = 2 : i64, tpu.core_type = #tpu.core_type<tc>, window_params = [{transform_indices = @transform_0, window_bounds = array<i64: 98>}, {pipeline_mode = #tpu.pipeline_mode<synchronous>, transform_indices = @transform_1, window_bounds = array<i64: 14, 256>}, {transform_indices = @transform_2, window_bounds = array<i64: 2, 4, 256>}, {transform_indices = @transform_3, window_bounds = array<i64: 2, 1, 256>}]} {
    %c0 = arith.constant 0 : index
    %c0_0 = arith.constant 0 : index
    %c0_1 = arith.constant 0 : index
    %0 = vector.load %arg3[%c0, %c0_0, %c0_1] : memref<2x4x256xf32, #tpu.memory_space<vmem>>, vector<2x1x256xf32>
    %1 = vector.shape_cast %0 : vector<2x1x256xf32> to vector<2x256xf32>
    %c0_2 = arith.constant 0 : index
    %c1 = arith.constant 1 : index
    %c0_3 = arith.constant 0 : index
    %2 = vector.load %arg3[%c0_2, %c1, %c0_3] : memref<2x4x256xf32, #tpu.memory_space<vmem>>, vector<2x1x256xf32>
    %3 = vector.shape_cast %2 : vector<2x1x256xf32> to vector<2x256xf32>
    %4 = arith.addf %1, %3 : vector<2x256xf32>
    %5 = arith.maximumf %1, %3 : vector<2x256xf32>
    %c0_4 = arith.constant 0 : index
    %c2 = arith.constant 2 : index
    %c0_5 = arith.constant 0 : index
    %6 = vector.load %arg3[%c0_4, %c2, %c0_5] : memref<2x4x256xf32, #tpu.memory_space<vmem>>, vector<2x1x256xf32>
    %7 = vector.shape_cast %6 : vector<2x1x256xf32> to vector<2x256xf32>
    %8 = arith.addf %4, %7 : vector<2x256xf32>
    %9 = arith.maximumf %5, %7 : vector<2x256xf32>
    %c0_6 = arith.constant 0 : index
    %c3 = arith.constant 3 : index
    %c0_7 = arith.constant 0 : index
    %10 = vector.load %arg3[%c0_6, %c3, %c0_7] : memref<2x4x256xf32, #tpu.memory_space<vmem>>, vector<2x1x256xf32>
    %11 = vector.shape_cast %10 : vector<2x1x256xf32> to vector<2x256xf32>
    %12 = arith.addf %8, %11 : vector<2x256xf32>
    %13 = arith.maximumf %9, %11 : vector<2x256xf32>
    %c0_8 = arith.constant 0 : index
    %c0_9 = arith.constant 0 : index
    %14 = vector.load %arg5[%c0_8, %c0_9] : memref<2x512xf32, #tpu.memory_space<vmem>>, vector<2x256xf32>
    tpu.vector_store %arg5[%c0_8, %c0_9], %12 {strides = array<i32>} : memref<2x512xf32, #tpu.memory_space<vmem>>, vector<2x256xf32>,
    %c0_10 = arith.constant 0 : index
    %c256 = arith.constant 256 : index
    %15 = vector.load %arg5[%c0_10, %c256] : memref<2x512xf32, #tpu.memory_space<vmem>>, vector<2x256xf32>
    tpu.vector_store %arg5[%c0_10, %c256], %12 {strides = array<i32>} : memref<2x512xf32, #tpu.memory_space<vmem>>, vector<2x256xf32>,
    %c0_11 = arith.constant 0 : index
    %c0_12 = arith.constant 0 : index
    %16 = vector.load %arg6[%c0_11, %c0_12] : memref<2x512xf32, #tpu.memory_space<vmem>>, vector<2x256xf32>
    tpu.vector_store %arg6[%c0_11, %c0_12], %13 {strides = array<i32>} : memref<2x512xf32, #tpu.memory_space<vmem>>, vector<2x256xf32>,
    %c0_13 = arith.constant 0 : index
    %c256_14 = arith.constant 256 : index
    %17 = vector.load %arg6[%c0_13, %c256_14] : memref<2x512xf32, #tpu.memory_space<vmem>>, vector<2x256xf32>
    tpu.vector_store %arg6[%c0_13, %c256_14], %13 {strides = array<i32>} : memref<2x512xf32, #tpu.memory_space<vmem>>, vector<2x256xf32>,
    %c0_15 = arith.constant 0 : index
    %18 = memref.load %arg1[%c0_15] : memref<98xf32, #tpu.memory_space<smem>>
    %c1_16 = arith.constant 1 : index
    %19 = memref.load %arg1[%c1_16] : memref<98xf32, #tpu.memory_space<smem>>
    %c2_17 = arith.constant 2 : index
    %20 = memref.load %arg1[%c2_17] : memref<98xf32, #tpu.memory_space<smem>>
    %c3_18 = arith.constant 3 : index
    %21 = memref.load %arg1[%c3_18] : memref<98xf32, #tpu.memory_space<smem>>
    %c4 = arith.constant 4 : index
    %22 = memref.load %arg1[%c4] : memref<98xf32, #tpu.memory_space<smem>>
    %c5 = arith.constant 5 : index
    %23 = memref.load %arg1[%c5] : memref<98xf32, #tpu.memory_space<smem>>
    %c6 = arith.constant 6 : index
    %24 = memref.load %arg1[%c6] : memref<98xf32, #tpu.memory_space<smem>>
    %c7 = arith.constant 7 : index
    %25 = memref.load %arg1[%c7] : memref<98xf32, #tpu.memory_space<smem>>
    %c8 = arith.constant 8 : index
    %26 = memref.load %arg1[%c8] : memref<98xf32, #tpu.memory_space<smem>>
    %c9 = arith.constant 9 : index
    %27 = memref.load %arg1[%c9] : memref<98xf32, #tpu.memory_space<smem>>
    %c10 = arith.constant 10 : index
    %28 = memref.load %arg1[%c10] : memref<98xf32, #tpu.memory_space<smem>>
    %c11 = arith.constant 11 : index
    %29 = memref.load %arg1[%c11] : memref<98xf32, #tpu.memory_space<smem>>
    %c12 = arith.constant 12 : index
    %30 = memref.load %arg1[%c12] : memref<98xf32, #tpu.memory_space<smem>>
    %c13 = arith.constant 13 : index
    %31 = memref.load %arg1[%c13] : memref<98xf32, #tpu.memory_space<smem>>
    %c14 = arith.constant 14 : index
    %32 = memref.load %arg1[%c14] : memref<98xf32, #tpu.memory_space<smem>>
    %c15 = arith.constant 15 : index
    %33 = memref.load %arg1[%c15] : memref<98xf32, #tpu.memory_space<smem>>
    %c16 = arith.constant 16 : index
    %34 = memref.load %arg1[%c16] : memref<98xf32, #tpu.memory_space<smem>>
    %c17 = arith.constant 17 : index
    %35 = memref.load %arg1[%c17] : memref<98xf32, #tpu.memory_space<smem>>
    %c18 = arith.constant 18 : index
    %36 = memref.load %arg1[%c18] : memref<98xf32, #tpu.memory_space<smem>>
    %c19 = arith.constant 19 : index
    %37 = memref.load %arg1[%c19] : memref<98xf32, #tpu.memory_space<smem>>
    %c20 = arith.constant 20 : index
    %38 = memref.load %arg1[%c20] : memref<98xf32, #tpu.memory_space<smem>>
    %c21 = arith.constant 21 : index
    %39 = memref.load %arg1[%c21] : memref<98xf32, #tpu.memory_space<smem>>
    %c22 = arith.constant 22 : index
    %40 = memref.load %arg1[%c22] : memref<98xf32, #tpu.memory_space<smem>>
    %c23 = arith.constant 23 : index
    %41 = memref.load %arg1[%c23] : memref<98xf32, #tpu.memory_space<smem>>
    %c24 = arith.constant 24 : index
    %42 = memref.load %arg1[%c24] : memref<98xf32, #tpu.memory_space<smem>>
    %c25 = arith.constant 25 : index
    %43 = memref.load %arg1[%c25] : memref<98xf32, #tpu.memory_space<smem>>
    %c26 = arith.constant 26 : index
    %44 = memref.load %arg1[%c26] : memref<98xf32, #tpu.memory_space<smem>>
    %c27 = arith.constant 27 : index
    %45 = memref.load %arg1[%c27] : memref<98xf32, #tpu.memory_space<smem>>
    %c28 = arith.constant 28 : index
    %46 = memref.load %arg1[%c28] : memref<98xf32, #tpu.memory_space<smem>>
    %c29 = arith.constant 29 : index
    %47 = memref.load %arg1[%c29] : memref<98xf32, #tpu.memory_space<smem>>
    %c30 = arith.constant 30 : index
    %48 = memref.load %arg1[%c30] : memref<98xf32, #tpu.memory_space<smem>>
    %c31 = arith.constant 31 : index
    %49 = memref.load %arg1[%c31] : memref<98xf32, #tpu.memory_space<smem>>
    %c32 = arith.constant 32 : index
    %50 = memref.load %arg1[%c32] : memref<98xf32, #tpu.memory_space<smem>>
    %c33 = arith.constant 33 : index
    %51 = memref.load %arg1[%c33] : memref<98xf32, #tpu.memory_space<smem>>
    %c34 = arith.constant 34 : index
    %52 = memref.load %arg1[%c34] : memref<98xf32, #tpu.memory_space<smem>>
    %c35 = arith.constant 35 : index
    %53 = memref.load %arg1[%c35] : memref<98xf32, #tpu.memory_space<smem>>
    %c36 = arith.constant 36 : index
    %54 = memref.load %arg1[%c36] : memref<98xf32, #tpu.memory_space<smem>>
    %c37 = arith.constant 37 : index
    %55 = memref.load %arg1[%c37] : memref<98xf32, #tpu.memory_space<smem>>
    %c38 = arith.constant 38 : index
    %56 = memref.load %arg1[%c38] : memref<98xf32, #tpu.memory_space<smem>>
    %c39 = arith.constant 39 : index
    %57 = memref.load %arg1[%c39] : memref<98xf32, #tpu.memory_space<smem>>
    %c40 = arith.constant 40 : index
    %58 = memref.load %arg1[%c40] : memref<98xf32, #tpu.memory_space<smem>>
    %c41 = arith.constant 41 : index
    %59 = memref.load %arg1[%c41] : memref<98xf32, #tpu.memory_space<smem>>
    %c42 = arith.constant 42 : index
    %60 = memref.load %arg1[%c42] : memref<98xf32, #tpu.memory_space<smem>>
    %c43 = arith.constant 43 : index
    %61 = memref.load %arg1[%c43] : memref<98xf32, #tpu.memory_space<smem>>
    %c44 = arith.constant 44 : index
    %62 = memref.load %arg1[%c44] : memref<98xf32, #tpu.memory_space<smem>>
    %c45 = arith.constant 45 : index
    %63 = memref.load %arg1[%c45] : memref<98xf32, #tpu.memory_space<smem>>
    %c46 = arith.constant 46 : index
    %64 = memref.load %arg1[%c46] : memref<98xf32, #tpu.memory_space<smem>>
    %c47 = arith.constant 47 : index
    %65 = memref.load %arg1[%c47] : memref<98xf32, #tpu.memory_space<smem>>
    %c48 = arith.constant 48 : index
    %66 = memref.load %arg1[%c48] : memref<98xf32, #tpu.memory_space<smem>>
    %c49 = arith.constant 49 : index
    %67 = memref.load %arg1[%c49] : memref<98xf32, #tpu.memory_space<smem>>
    %c50 = arith.constant 50 : index
    %68 = memref.load %arg1[%c50] : memref<98xf32, #tpu.memory_space<smem>>
    %c51 = arith.constant 51 : index
    %69 = memref.load %arg1[%c51] : memref<98xf32, #tpu.memory_space<smem>>
    %c52 = arith.constant 52 : index
    %70 = memref.load %arg1[%c52] : memref<98xf32, #tpu.memory_space<smem>>
    %c53 = arith.constant 53 : index
    %71 = memref.load %arg1[%c53] : memref<98xf32, #tpu.memory_space<smem>>
    %c54 = arith.constant 54 : index
    %72 = memref.load %arg1[%c54] : memref<98xf32, #tpu.memory_space<smem>>
    %c55 = arith.constant 55 : index
    %73 = memref.load %arg1[%c55] : memref<98xf32, #tpu.memory_space<smem>>
    %c56 = arith.constant 56 : index
    %74 = memref.load %arg1[%c56] : memref<98xf32, #tpu.memory_space<smem>>
    %c57 = arith.constant 57 : index
    %75 = memref.load %arg1[%c57] : memref<98xf32, #tpu.memory_space<smem>>
    %c58 = arith.constant 58 : index
    %76 = memref.load %arg1[%c58] : memref<98xf32, #tpu.memory_space<smem>>
    %c59 = arith.constant 59 : index
    %77 = memref.load %arg1[%c59] : memref<98xf32, #tpu.memory_space<smem>>
    %c60 = arith.constant 60 : index
    %78 = memref.load %arg1[%c60] : memref<98xf32, #tpu.memory_space<smem>>
    %c61 = arith.constant 61 : index
    %79 = memref.load %arg1[%c61] : memref<98xf32, #tpu.memory_space<smem>>
    %c62 = arith.constant 62 : index
    %80 = memref.load %arg1[%c62] : memref<98xf32, #tpu.memory_space<smem>>
    %c63 = arith.constant 63 : index
    %81 = memref.load %arg1[%c63] : memref<98xf32, #tpu.memory_space<smem>>
    %c64 = arith.constant 64 : index
    %82 = memref.load %arg1[%c64] : memref<98xf32, #tpu.memory_space<smem>>
    %c65 = arith.constant 65 : index
    %83 = memref.load %arg1[%c65] : memref<98xf32, #tpu.memory_space<smem>>
    %c66 = arith.constant 66 : index
    %84 = memref.load %arg1[%c66] : memref<98xf32, #tpu.memory_space<smem>>
    %c67 = arith.constant 67 : index
    %85 = memref.load %arg1[%c67] : memref<98xf32, #tpu.memory_space<smem>>
    %c68 = arith.constant 68 : index
    %86 = memref.load %arg1[%c68] : memref<98xf32, #tpu.memory_space<smem>>
    %c69 = arith.constant 69 : index
    %87 = memref.load %arg1[%c69] : memref<98xf32, #tpu.memory_space<smem>>
    %c70 = arith.constant 70 : index
    %88 = memref.load %arg1[%c70] : memref<98xf32, #tpu.memory_space<smem>>
    %c71 = arith.constant 71 : index
    %89 = memref.load %arg1[%c71] : memref<98xf32, #tpu.memory_space<smem>>
    %c72 = arith.constant 72 : index
    %90 = memref.load %arg1[%c72] : memref<98xf32, #tpu.memory_space<smem>>
    %c73 = arith.constant 73 : index
    %91 = memref.load %arg1[%c73] : memref<98xf32, #tpu.memory_space<smem>>
    %c74 = arith.constant 74 : index
    %92 = memref.load %arg1[%c74] : memref<98xf32, #tpu.memory_space<smem>>
    %c75 = arith.constant 75 : index
    %93 = memref.load %arg1[%c75] : memref<98xf32, #tpu.memory_space<smem>>
    %c76 = arith.constant 76 : index
    %94 = memref.load %arg1[%c76] : memref<98xf32, #tpu.memory_space<smem>>
    %c77 = arith.constant 77 : index
    %95 = memref.load %arg1[%c77] : memref<98xf32, #tpu.memory_space<smem>>
    %c78 = arith.constant 78 : index
    %96 = memref.load %arg1[%c78] : memref<98xf32, #tpu.memory_space<smem>>
    %c79 = arith.constant 79 : index
    %97 = memref.load %arg1[%c79] : memref<98xf32, #tpu.memory_space<smem>>
    %c80 = arith.constant 80 : index
    %98 = memref.load %arg1[%c80] : memref<98xf32, #tpu.memory_space<smem>>
    %c81 = arith.constant 81 : index
    %99 = memref.load %arg1[%c81] : memref<98xf32, #tpu.memory_space<smem>>
    %c82 = arith.constant 82 : index
    %100 = memref.load %arg1[%c82] : memref<98xf32, #tpu.memory_space<smem>>
    %c83 = arith.constant 83 : index
    %101 = memref.load %arg1[%c83] : memref<98xf32, #tpu.memory_space<smem>>
    %c84 = arith.constant 84 : index
    %102 = memref.load %arg1[%c84] : memref<98xf32, #tpu.memory_space<smem>>
    %c85 = arith.constant 85 : index
    %103 = memref.load %arg1[%c85] : memref<98xf32, #tpu.memory_space<smem>>
    %c86 = arith.constant 86 : index
    %104 = memref.load %arg1[%c86] : memref<98xf32, #tpu.memory_space<smem>>
    %c87 = arith.constant 87 : index
    %105 = memref.load %arg1[%c87] : memref<98xf32, #tpu.memory_space<smem>>
    %c88 = arith.constant 88 : index
    %106 = memref.load %arg1[%c88] : memref<98xf32, #tpu.memory_space<smem>>
    %c89 = arith.constant 89 : index
    %107 = memref.load %arg1[%c89] : memref<98xf32, #tpu.memory_space<smem>>
    %c90 = arith.constant 90 : index
    %108 = memref.load %arg1[%c90] : memref<98xf32, #tpu.memory_space<smem>>
    %c91 = arith.constant 91 : index
    %109 = memref.load %arg1[%c91] : memref<98xf32, #tpu.memory_space<smem>>
    %c92 = arith.constant 92 : index
    %110 = memref.load %arg1[%c92] : memref<98xf32, #tpu.memory_space<smem>>
    %c93 = arith.constant 93 : index
    %111 = memref.load %arg1[%c93] : memref<98xf32, #tpu.memory_space<smem>>
    %c94 = arith.constant 94 : index
    %112 = memref.load %arg1[%c94] : memref<98xf32, #tpu.memory_space<smem>>
    %c95 = arith.constant 95 : index
    %113 = memref.load %arg1[%c95] : memref<98xf32, #tpu.memory_space<smem>>
    %c96 = arith.constant 96 : index
    %114 = memref.load %arg1[%c96] : memref<98xf32, #tpu.memory_space<smem>>
    %c97 = arith.constant 97 : index
    %115 = memref.load %arg1[%c97] : memref<98xf32, #tpu.memory_space<smem>>
    %c0_19 = arith.constant 0 : index
    %c0_20 = arith.constant 0 : index
    %116 = vector.load %arg2[%c0_19, %c0_20] : memref<14x256xf32, #tpu.memory_space<vmem>>, vector<1x256xf32>
    %c1_21 = arith.constant 1 : index
    %c0_22 = arith.constant 0 : index
    %117 = vector.load %arg2[%c1_21, %c0_22] : memref<14x256xf32, #tpu.memory_space<vmem>>, vector<1x256xf32>
    %c2_23 = arith.constant 2 : index
    %c0_24 = arith.constant 0 : index
    %118 = vector.load %arg2[%c2_23, %c0_24] : memref<14x256xf32, #tpu.memory_space<vmem>>, vector<1x256xf32>
    %c3_25 = arith.constant 3 : index
    %c0_26 = arith.constant 0 : index
    %119 = vector.load %arg2[%c3_25, %c0_26] : memref<14x256xf32, #tpu.memory_space<vmem>>, vector<1x256xf32>
    %c4_27 = arith.constant 4 : index
    %c0_28 = arith.constant 0 : index
    %120 = vector.load %arg2[%c4_27, %c0_28] : memref<14x256xf32, #tpu.memory_space<vmem>>, vector<1x256xf32>
    %c5_29 = arith.constant 5 : index
    %c0_30 = arith.constant 0 : index
    %121 = vector.load %arg2[%c5_29, %c0_30] : memref<14x256xf32, #tpu.memory_space<vmem>>, vector<1x256xf32>
    %c6_31 = arith.constant 6 : index
    %c0_32 = arith.constant 0 : index
    %122 = vector.load %arg2[%c6_31, %c0_32] : memref<14x256xf32, #tpu.memory_space<vmem>>, vector<1x256xf32>
    %c7_33 = arith.constant 7 : index
    %c0_34 = arith.constant 0 : index
    %123 = vector.load %arg2[%c7_33, %c0_34] : memref<14x256xf32, #tpu.memory_space<vmem>>, vector<1x256xf32>
    %c8_35 = arith.constant 8 : index
    %c0_36 = arith.constant 0 : index
    %124 = vector.load %arg2[%c8_35, %c0_36] : memref<14x256xf32, #tpu.memory_space<vmem>>, vector<1x256xf32>
    %c9_37 = arith.constant 9 : index
    %c0_38 = arith.constant 0 : index
    %125 = vector.load %arg2[%c9_37, %c0_38] : memref<14x256xf32, #tpu.memory_space<vmem>>, vector<1x256xf32>
    %c10_39 = arith.constant 10 : index
    %c0_40 = arith.constant 0 : index
    %126 = vector.load %arg2[%c10_39, %c0_40] : memref<14x256xf32, #tpu.memory_space<vmem>>, vector<1x256xf32>
    %c11_41 = arith.constant 11 : index
    %c0_42 = arith.constant 0 : index
    %127 = vector.load %arg2[%c11_41, %c0_42] : memref<14x256xf32, #tpu.memory_space<vmem>>, vector<1x256xf32>
    %c12_43 = arith.constant 12 : index
    %c0_44 = arith.constant 0 : index
    %128 = vector.load %arg2[%c12_43, %c0_44] : memref<14x256xf32, #tpu.memory_space<vmem>>, vector<1x256xf32>
    %c13_45 = arith.constant 13 : index
    %c0_46 = arith.constant 0 : index
    %129 = vector.load %arg2[%c13_45, %c0_46] : memref<14x256xf32, #tpu.memory_space<vmem>>, vector<1x256xf32>
    %cst = arith.constant 0.000000e+00 : f32
    %130 = vector.broadcast %cst : f32 to vector<2x256xf32>
    %c0_47 = arith.constant 0 : index
    %c205 = arith.constant 205 : index
    %131 = vector.load %arg5[%c0_47, %c205] : memref<2x512xf32, #tpu.memory_space<vmem>>, vector<2x256xf32>
    %c0_48 = arith.constant 0 : index
    %c205_49 = arith.constant 205 : index
    %132 = vector.load %arg6[%c0_48, %c205_49] : memref<2x512xf32, #tpu.memory_space<vmem>>, vector<2x256xf32>
    %133 = arith.mulf %116, %123 : vector<1x256xf32>
    %134 = vector.broadcast %18 : f32 to vector<2x256xf32>
    %135 = arith.mulf %134, %131 : vector<2x256xf32>
    %136 = vector.broadcast %67 : f32 to vector<2x256xf32>
    %137 = arith.mulf %136, %132 : vector<2x256xf32>
    %138 = arith.addf %135, %137 : vector<2x256xf32>
    %139 = vector.broadcast %133 : vector<1x256xf32> to vector<2x256xf32>
    %140 = arith.mulf %138, %139 : vector<2x256xf32>
    %141 = arith.addf %130, %140 : vector<2x256xf32>
    %c0_50 = arith.constant 0 : index
    %c206 = arith.constant 206 : index
    %142 = vector.load %arg5[%c0_50, %c206] : memref<2x512xf32, #tpu.memory_space<vmem>>, vector<2x256xf32>
    %c0_51 = arith.constant 0 : index
    %c206_52 = arith.constant 206 : index
    %143 = vector.load %arg6[%c0_51, %c206_52] : memref<2x512xf32, #tpu.memory_space<vmem>>, vector<2x256xf32>
    %144 = arith.mulf %117, %123 : vector<1x256xf32>
    %145 = vector.broadcast %19 : f32 to vector<2x256xf32>
    %146 = arith.mulf %145, %142 : vector<2x256xf32>
    %147 = vector.broadcast %68 : f32 to vector<2x256xf32>
    %148 = arith.mulf %147, %143 : vector<2x256xf32>
    %149 = arith.addf %146, %148 : vector<2x256xf32>
    %150 = vector.broadcast %144 : vector<1x256xf32> to vector<2x256xf32>
    %151 = arith.mulf %149, %150 : vector<2x256xf32>
    %152 = arith.addf %141, %151 : vector<2x256xf32>
    %c0_53 = arith.constant 0 : index
    %c207 = arith.constant 207 : index
    %153 = vector.load %arg5[%c0_53, %c207] : memref<2x512xf32, #tpu.memory_space<vmem>>, vector<2x256xf32>
    %c0_54 = arith.constant 0 : index
    %c207_55 = arith.constant 207 : index
    %154 = vector.load %arg6[%c0_54, %c207_55] : memref<2x512xf32, #tpu.memory_space<vmem>>, vector<2x256xf32>
    %155 = arith.mulf %118, %123 : vector<1x256xf32>
    %156 = vector.broadcast %20 : f32 to vector<2x256xf32>
    %157 = arith.mulf %156, %153 : vector<2x256xf32>
    %158 = vector.broadcast %69 : f32 to vector<2x256xf32>
    %159 = arith.mulf %158, %154 : vector<2x256xf32>
    %160 = arith.addf %157, %159 : vector<2x256xf32>
    %161 = vector.broadcast %155 : vector<1x256xf32> to vector<2x256xf32>
    %162 = arith.mulf %160, %161 : vector<2x256xf32>
    %163 = arith.addf %152, %162 : vector<2x256xf32>
    %c0_56 = arith.constant 0 : index
    %c208 = arith.constant 208 : index
    %164 = vector.load %arg5[%c0_56, %c208] : memref<2x512xf32, #tpu.memory_space<vmem>>, vector<2x256xf32>
    %c0_57 = arith.constant 0 : index
    %c208_58 = arith.constant 208 : index
    %165 = vector.load %arg6[%c0_57, %c208_58] : memref<2x512xf32, #tpu.memory_space<vmem>>, vector<2x256xf32>
    %166 = arith.mulf %119, %123 : vector<1x256xf32>
    %167 = vector.broadcast %21 : f32 to vector<2x256xf32>
    %168 = arith.mulf %167, %164 : vector<2x256xf32>
    %169 = vector.broadcast %70 : f32 to vector<2x256xf32>
    %170 = arith.mulf %169, %165 : vector<2x256xf32>
    %171 = arith.addf %168, %170 : vector<2x256xf32>
    %172 = vector.broadcast %166 : vector<1x256xf32> to vector<2x256xf32>
    %173 = arith.mulf %171, %172 : vector<2x256xf32>
    %174 = arith.addf %163, %173 : vector<2x256xf32>
    %c0_59 = arith.constant 0 : index
    %c209 = arith.constant 209 : index
    %175 = vector.load %arg5[%c0_59, %c209] : memref<2x512xf32, #tpu.memory_space<vmem>>, vector<2x256xf32>
    %c0_60 = arith.constant 0 : index
    %c209_61 = arith.constant 209 : index
    %176 = vector.load %arg6[%c0_60, %c209_61] : memref<2x512xf32, #tpu.memory_space<vmem>>, vector<2x256xf32>
    %177 = arith.mulf %120, %123 : vector<1x256xf32>
    %178 = vector.broadcast %22 : f32 to vector<2x256xf32>
    %179 = arith.mulf %178, %175 : vector<2x256xf32>
    %180 = vector.broadcast %71 : f32 to vector<2x256xf32>
    %181 = arith.mulf %180, %176 : vector<2x256xf32>
    %182 = arith.addf %179, %181 : vector<2x256xf32>
    %183 = vector.broadcast %177 : vector<1x256xf32> to vector<2x256xf32>
    %184 = arith.mulf %182, %183 : vector<2x256xf32>
    %185 = arith.addf %174, %184 : vector<2x256xf32>
    %c0_62 = arith.constant 0 : index
    %c210 = arith.constant 210 : index
    %186 = vector.load %arg5[%c0_62, %c210] : memref<2x512xf32, #tpu.memory_space<vmem>>, vector<2x256xf32>
    %c0_63 = arith.constant 0 : index
    %c210_64 = arith.constant 210 : index
    %187 = vector.load %arg6[%c0_63, %c210_64] : memref<2x512xf32, #tpu.memory_space<vmem>>, vector<2x256xf32>
    %188 = arith.mulf %121, %123 : vector<1x256xf32>
    %189 = vector.broadcast %23 : f32 to vector<2x256xf32>
    %190 = arith.mulf %189, %186 : vector<2x256xf32>
    %191 = vector.broadcast %72 : f32 to vector<2x256xf32>
    %192 = arith.mulf %191, %187 : vector<2x256xf32>
    %193 = arith.addf %190, %192 : vector<2x256xf32>
    %194 = vector.broadcast %188 : vector<1x256xf32> to vector<2x256xf32>
    %195 = arith.mulf %193, %194 : vector<2x256xf32>
    %196 = arith.addf %185, %195 : vector<2x256xf32>
    %c0_65 = arith.constant 0 : index
    %c211 = arith.constant 211 : index
    %197 = vector.load %arg5[%c0_65, %c211] : memref<2x512xf32, #tpu.memory_space<vmem>>, vector<2x256xf32>
    %c0_66 = arith.constant 0 : index
    %c211_67 = arith.constant 211 : index
    %198 = vector.load %arg6[%c0_66, %c211_67] : memref<2x512xf32, #tpu.memory_space<vmem>>, vector<2x256xf32>
    %199 = arith.mulf %122, %123 : vector<1x256xf32>
    %200 = vector.broadcast %24 : f32 to vector<2x256xf32>
    %201 = arith.mulf %200, %197 : vector<2x256xf32>
    %202 = vector.broadcast %73 : f32 to vector<2x256xf32>
    %203 = arith.mulf %202, %198 : vector<2x256xf32>
    %204 = arith.addf %201, %203 : vector<2x256xf32>
    %205 = vector.broadcast %199 : vector<1x256xf32> to vector<2x256xf32>
    %206 = arith.mulf %204, %205 : vector<2x256xf32>
    %207 = arith.addf %196, %206 : vector<2x256xf32>
    %c0_68 = arith.constant 0 : index
    %c221 = arith.constant 221 : index
    %208 = vector.load %arg5[%c0_68, %c221] : memref<2x512xf32, #tpu.memory_space<vmem>>, vector<2x256xf32>
    %c0_69 = arith.constant 0 : index
    %c221_70 = arith.constant 221 : index
    %209 = vector.load %arg6[%c0_69, %c221_70] : memref<2x512xf32, #tpu.memory_space<vmem>>, vector<2x256xf32>
    %210 = arith.mulf %116, %124 : vector<1x256xf32>
    %211 = vector.broadcast %25 : f32 to vector<2x256xf32>
    %212 = arith.mulf %211, %208 : vector<2x256xf32>
    %213 = vector.broadcast %74 : f32 to vector<2x256xf32>
    %214 = arith.mulf %213, %209 : vector<2x256xf32>
    %215 = arith.addf %212, %214 : vector<2x256xf32>
    %216 = vector.broadcast %210 : vector<1x256xf32> to vector<2x256xf32>
    %217 = arith.mulf %215, %216 : vector<2x256xf32>
    %218 = arith.addf %207, %217 : vector<2x256xf32>
    %c0_71 = arith.constant 0 : index
    %c222 = arith.constant 222 : index
    %219 = vector.load %arg5[%c0_71, %c222] : memref<2x512xf32, #tpu.memory_space<vmem>>, vector<2x256xf32>
    %c0_72 = arith.constant 0 : index
    %c222_73 = arith.constant 222 : index
    %220 = vector.load %arg6[%c0_72, %c222_73] : memref<2x512xf32, #tpu.memory_space<vmem>>, vector<2x256xf32>
    %221 = arith.mulf %117, %124 : vector<1x256xf32>
    %222 = vector.broadcast %26 : f32 to vector<2x256xf32>
    %223 = arith.mulf %222, %219 : vector<2x256xf32>
    %224 = vector.broadcast %75 : f32 to vector<2x256xf32>
    %225 = arith.mulf %224, %220 : vector<2x256xf32>
    %226 = arith.addf %223, %225 : vector<2x256xf32>
    %227 = vector.broadcast %221 : vector<1x256xf32> to vector<2x256xf32>
    %228 = arith.mulf %226, %227 : vector<2x256xf32>
    %229 = arith.addf %218, %228 : vector<2x256xf32>
    %c0_74 = arith.constant 0 : index
    %c223 = arith.constant 223 : index
    %230 = vector.load %arg5[%c0_74, %c223] : memref<2x512xf32, #tpu.memory_space<vmem>>, vector<2x256xf32>
    %c0_75 = arith.constant 0 : index
    %c223_76 = arith.constant 223 : index
    %231 = vector.load %arg6[%c0_75, %c223_76] : memref<2x512xf32, #tpu.memory_space<vmem>>, vector<2x256xf32>
    %232 = arith.mulf %118, %124 : vector<1x256xf32>
    %233 = vector.broadcast %27 : f32 to vector<2x256xf32>
    %234 = arith.mulf %233, %230 : vector<2x256xf32>
    %235 = vector.broadcast %76 : f32 to vector<2x256xf32>
    %236 = arith.mulf %235, %231 : vector<2x256xf32>
    %237 = arith.addf %234, %236 : vector<2x256xf32>
    %238 = vector.broadcast %232 : vector<1x256xf32> to vector<2x256xf32>
    %239 = arith.mulf %237, %238 : vector<2x256xf32>
    %240 = arith.addf %229, %239 : vector<2x256xf32>
    %c0_77 = arith.constant 0 : index
    %c224 = arith.constant 224 : index
    %241 = vector.load %arg5[%c0_77, %c224] : memref<2x512xf32, #tpu.memory_space<vmem>>, vector<2x256xf32>
    %c0_78 = arith.constant 0 : index
    %c224_79 = arith.constant 224 : index
    %242 = vector.load %arg6[%c0_78, %c224_79] : memref<2x512xf32, #tpu.memory_space<vmem>>, vector<2x256xf32>
    %243 = arith.mulf %119, %124 : vector<1x256xf32>
    %244 = vector.broadcast %28 : f32 to vector<2x256xf32>
    %245 = arith.mulf %244, %241 : vector<2x256xf32>
    %246 = vector.broadcast %77 : f32 to vector<2x256xf32>
    %247 = arith.mulf %246, %242 : vector<2x256xf32>
    %248 = arith.addf %245, %247 : vector<2x256xf32>
    %249 = vector.broadcast %243 : vector<1x256xf32> to vector<2x256xf32>
    %250 = arith.mulf %248, %249 : vector<2x256xf32>
    %251 = arith.addf %240, %250 : vector<2x256xf32>
    %c0_80 = arith.constant 0 : index
    %c225 = arith.constant 225 : index
    %252 = vector.load %arg5[%c0_80, %c225] : memref<2x512xf32, #tpu.memory_space<vmem>>, vector<2x256xf32>
    %c0_81 = arith.constant 0 : index
    %c225_82 = arith.constant 225 : index
    %253 = vector.load %arg6[%c0_81, %c225_82] : memref<2x512xf32, #tpu.memory_space<vmem>>, vector<2x256xf32>
    %254 = arith.mulf %120, %124 : vector<1x256xf32>
    %255 = vector.broadcast %29 : f32 to vector<2x256xf32>
    %256 = arith.mulf %255, %252 : vector<2x256xf32>
    %257 = vector.broadcast %78 : f32 to vector<2x256xf32>
    %258 = arith.mulf %257, %253 : vector<2x256xf32>
    %259 = arith.addf %256, %258 : vector<2x256xf32>
    %260 = vector.broadcast %254 : vector<1x256xf32> to vector<2x256xf32>
    %261 = arith.mulf %259, %260 : vector<2x256xf32>
    %262 = arith.addf %251, %261 : vector<2x256xf32>
    %c0_83 = arith.constant 0 : index
    %c226 = arith.constant 226 : index
    %263 = vector.load %arg5[%c0_83, %c226] : memref<2x512xf32, #tpu.memory_space<vmem>>, vector<2x256xf32>
    %c0_84 = arith.constant 0 : index
    %c226_85 = arith.constant 226 : index
    %264 = vector.load %arg6[%c0_84, %c226_85] : memref<2x512xf32, #tpu.memory_space<vmem>>, vector<2x256xf32>
    %265 = arith.mulf %121, %124 : vector<1x256xf32>
    %266 = vector.broadcast %30 : f32 to vector<2x256xf32>
    %267 = arith.mulf %266, %263 : vector<2x256xf32>
    %268 = vector.broadcast %79 : f32 to vector<2x256xf32>
    %269 = arith.mulf %268, %264 : vector<2x256xf32>
    %270 = arith.addf %267, %269 : vector<2x256xf32>
    %271 = vector.broadcast %265 : vector<1x256xf32> to vector<2x256xf32>
    %272 = arith.mulf %270, %271 : vector<2x256xf32>
    %273 = arith.addf %262, %272 : vector<2x256xf32>
    %c0_86 = arith.constant 0 : index
    %c227 = arith.constant 227 : index
    %274 = vector.load %arg5[%c0_86, %c227] : memref<2x512xf32, #tpu.memory_space<vmem>>, vector<2x256xf32>
    %c0_87 = arith.constant 0 : index
    %c227_88 = arith.constant 227 : index
    %275 = vector.load %arg6[%c0_87, %c227_88] : memref<2x512xf32, #tpu.memory_space<vmem>>, vector<2x256xf32>
    %276 = arith.mulf %122, %124 : vector<1x256xf32>
    %277 = vector.broadcast %31 : f32 to vector<2x256xf32>
    %278 = arith.mulf %277, %274 : vector<2x256xf32>
    %279 = vector.broadcast %80 : f32 to vector<2x256xf32>
    %280 = arith.mulf %279, %275 : vector<2x256xf32>
    %281 = arith.addf %278, %280 : vector<2x256xf32>
    %282 = vector.broadcast %276 : vector<1x256xf32> to vector<2x256xf32>
    %283 = arith.mulf %281, %282 : vector<2x256xf32>
    %284 = arith.addf %273, %283 : vector<2x256xf32>
    %c0_89 = arith.constant 0 : index
    %c237 = arith.constant 237 : index
    %285 = vector.load %arg5[%c0_89, %c237] : memref<2x512xf32, #tpu.memory_space<vmem>>, vector<2x256xf32>
    %c0_90 = arith.constant 0 : index
    %c237_91 = arith.constant 237 : index
    %286 = vector.load %arg6[%c0_90, %c237_91] : memref<2x512xf32, #tpu.memory_space<vmem>>, vector<2x256xf32>
    %287 = arith.mulf %116, %125 : vector<1x256xf32>
    %288 = vector.broadcast %32 : f32 to vector<2x256xf32>
    %289 = arith.mulf %288, %285 : vector<2x256xf32>
    %290 = vector.broadcast %81 : f32 to vector<2x256xf32>
    %291 = arith.mulf %290, %286 : vector<2x256xf32>
    %292 = arith.addf %289, %291 : vector<2x256xf32>
    %293 = vector.broadcast %287 : vector<1x256xf32> to vector<2x256xf32>
    %294 = arith.mulf %292, %293 : vector<2x256xf32>
    %295 = arith.addf %284, %294 : vector<2x256xf32>
    %c0_92 = arith.constant 0 : index
    %c238 = arith.constant 238 : index
    %296 = vector.load %arg5[%c0_92, %c238] : memref<2x512xf32, #tpu.memory_space<vmem>>, vector<2x256xf32>
    %c0_93 = arith.constant 0 : index
    %c238_94 = arith.constant 238 : index
    %297 = vector.load %arg6[%c0_93, %c238_94] : memref<2x512xf32, #tpu.memory_space<vmem>>, vector<2x256xf32>
    %298 = arith.mulf %117, %125 : vector<1x256xf32>
    %299 = vector.broadcast %33 : f32 to vector<2x256xf32>
    %300 = arith.mulf %299, %296 : vector<2x256xf32>
    %301 = vector.broadcast %82 : f32 to vector<2x256xf32>
    %302 = arith.mulf %301, %297 : vector<2x256xf32>
    %303 = arith.addf %300, %302 : vector<2x256xf32>
    %304 = vector.broadcast %298 : vector<1x256xf32> to vector<2x256xf32>
    %305 = arith.mulf %303, %304 : vector<2x256xf32>
    %306 = arith.addf %295, %305 : vector<2x256xf32>
    %c0_95 = arith.constant 0 : index
    %c239 = arith.constant 239 : index
    %307 = vector.load %arg5[%c0_95, %c239] : memref<2x512xf32, #tpu.memory_space<vmem>>, vector<2x256xf32>
    %c0_96 = arith.constant 0 : index
    %c239_97 = arith.constant 239 : index
    %308 = vector.load %arg6[%c0_96, %c239_97] : memref<2x512xf32, #tpu.memory_space<vmem>>, vector<2x256xf32>
    %309 = arith.mulf %118, %125 : vector<1x256xf32>
    %310 = vector.broadcast %34 : f32 to vector<2x256xf32>
    %311 = arith.mulf %310, %307 : vector<2x256xf32>
    %312 = vector.broadcast %83 : f32 to vector<2x256xf32>
    %313 = arith.mulf %312, %308 : vector<2x256xf32>
    %314 = arith.addf %311, %313 : vector<2x256xf32>
    %315 = vector.broadcast %309 : vector<1x256xf32> to vector<2x256xf32>
    %316 = arith.mulf %314, %315 : vector<2x256xf32>
    %317 = arith.addf %306, %316 : vector<2x256xf32>
    %c0_98 = arith.constant 0 : index
    %c240 = arith.constant 240 : index
    %318 = vector.load %arg5[%c0_98, %c240] : memref<2x512xf32, #tpu.memory_space<vmem>>, vector<2x256xf32>
    %c0_99 = arith.constant 0 : index
    %c240_100 = arith.constant 240 : index
    %319 = vector.load %arg6[%c0_99, %c240_100] : memref<2x512xf32, #tpu.memory_space<vmem>>, vector<2x256xf32>
    %320 = arith.mulf %119, %125 : vector<1x256xf32>
    %321 = vector.broadcast %35 : f32 to vector<2x256xf32>
    %322 = arith.mulf %321, %318 : vector<2x256xf32>
    %323 = vector.broadcast %84 : f32 to vector<2x256xf32>
    %324 = arith.mulf %323, %319 : vector<2x256xf32>
    %325 = arith.addf %322, %324 : vector<2x256xf32>
    %326 = vector.broadcast %320 : vector<1x256xf32> to vector<2x256xf32>
    %327 = arith.mulf %325, %326 : vector<2x256xf32>
    %328 = arith.addf %317, %327 : vector<2x256xf32>
    %c0_101 = arith.constant 0 : index
    %c241 = arith.constant 241 : index
    %329 = vector.load %arg5[%c0_101, %c241] : memref<2x512xf32, #tpu.memory_space<vmem>>, vector<2x256xf32>
    %c0_102 = arith.constant 0 : index
    %c241_103 = arith.constant 241 : index
    %330 = vector.load %arg6[%c0_102, %c241_103] : memref<2x512xf32, #tpu.memory_space<vmem>>, vector<2x256xf32>
    %331 = arith.mulf %120, %125 : vector<1x256xf32>
    %332 = vector.broadcast %36 : f32 to vector<2x256xf32>
    %333 = arith.mulf %332, %329 : vector<2x256xf32>
    %334 = vector.broadcast %85 : f32 to vector<2x256xf32>
    %335 = arith.mulf %334, %330 : vector<2x256xf32>
    %336 = arith.addf %333, %335 : vector<2x256xf32>
    %337 = vector.broadcast %331 : vector<1x256xf32> to vector<2x256xf32>
    %338 = arith.mulf %336, %337 : vector<2x256xf32>
    %339 = arith.addf %328, %338 : vector<2x256xf32>
    %c0_104 = arith.constant 0 : index
    %c242 = arith.constant 242 : index
    %340 = vector.load %arg5[%c0_104, %c242] : memref<2x512xf32, #tpu.memory_space<vmem>>, vector<2x256xf32>
    %c0_105 = arith.constant 0 : index
    %c242_106 = arith.constant 242 : index
    %341 = vector.load %arg6[%c0_105, %c242_106] : memref<2x512xf32, #tpu.memory_space<vmem>>, vector<2x256xf32>
    %342 = arith.mulf %121, %125 : vector<1x256xf32>
    %343 = vector.broadcast %37 : f32 to vector<2x256xf32>
    %344 = arith.mulf %343, %340 : vector<2x256xf32>
    %345 = vector.broadcast %86 : f32 to vector<2x256xf32>
    %346 = arith.mulf %345, %341 : vector<2x256xf32>
    %347 = arith.addf %344, %346 : vector<2x256xf32>
    %348 = vector.broadcast %342 : vector<1x256xf32> to vector<2x256xf32>
    %349 = arith.mulf %347, %348 : vector<2x256xf32>
    %350 = arith.addf %339, %349 : vector<2x256xf32>
    %c0_107 = arith.constant 0 : index
    %c243 = arith.constant 243 : index
    %351 = vector.load %arg5[%c0_107, %c243] : memref<2x512xf32, #tpu.memory_space<vmem>>, vector<2x256xf32>
    %c0_108 = arith.constant 0 : index
    %c243_109 = arith.constant 243 : index
    %352 = vector.load %arg6[%c0_108, %c243_109] : memref<2x512xf32, #tpu.memory_space<vmem>>, vector<2x256xf32>
    %353 = arith.mulf %122, %125 : vector<1x256xf32>
    %354 = vector.broadcast %38 : f32 to vector<2x256xf32>
    %355 = arith.mulf %354, %351 : vector<2x256xf32>
    %356 = vector.broadcast %87 : f32 to vector<2x256xf32>
    %357 = arith.mulf %356, %352 : vector<2x256xf32>
    %358 = arith.addf %355, %357 : vector<2x256xf32>
    %359 = vector.broadcast %353 : vector<1x256xf32> to vector<2x256xf32>
    %360 = arith.mulf %358, %359 : vector<2x256xf32>
    %361 = arith.addf %350, %360 : vector<2x256xf32>
    %c0_110 = arith.constant 0 : index
    %c253 = arith.constant 253 : index
    %362 = vector.load %arg5[%c0_110, %c253] : memref<2x512xf32, #tpu.memory_space<vmem>>, vector<2x256xf32>
    %c0_111 = arith.constant 0 : index
    %c253_112 = arith.constant 253 : index
    %363 = vector.load %arg6[%c0_111, %c253_112] : memref<2x512xf32, #tpu.memory_space<vmem>>, vector<2x256xf32>
    %364 = arith.mulf %116, %126 : vector<1x256xf32>
    %365 = vector.broadcast %39 : f32 to vector<2x256xf32>
    %366 = arith.mulf %365, %362 : vector<2x256xf32>
    %367 = vector.broadcast %88 : f32 to vector<2x256xf32>
    %368 = arith.mulf %367, %363 : vector<2x256xf32>
    %369 = arith.addf %366, %368 : vector<2x256xf32>
    %370 = vector.broadcast %364 : vector<1x256xf32> to vector<2x256xf32>
    %371 = arith.mulf %369, %370 : vector<2x256xf32>
    %372 = arith.addf %361, %371 : vector<2x256xf32>
    %c0_113 = arith.constant 0 : index
    %c254 = arith.constant 254 : index
    %373 = vector.load %arg5[%c0_113, %c254] : memref<2x512xf32, #tpu.memory_space<vmem>>, vector<2x256xf32>
    %c0_114 = arith.constant 0 : index
    %c254_115 = arith.constant 254 : index
    %374 = vector.load %arg6[%c0_114, %c254_115] : memref<2x512xf32, #tpu.memory_space<vmem>>, vector<2x256xf32>
    %375 = arith.mulf %117, %126 : vector<1x256xf32>
    %376 = vector.broadcast %40 : f32 to vector<2x256xf32>
    %377 = arith.mulf %376, %373 : vector<2x256xf32>
    %378 = vector.broadcast %89 : f32 to vector<2x256xf32>
    %379 = arith.mulf %378, %374 : vector<2x256xf32>
    %380 = arith.addf %377, %379 : vector<2x256xf32>
    %381 = vector.broadcast %375 : vector<1x256xf32> to vector<2x256xf32>
    %382 = arith.mulf %380, %381 : vector<2x256xf32>
    %383 = arith.addf %372, %382 : vector<2x256xf32>
    %c0_116 = arith.constant 0 : index
    %c255 = arith.constant 255 : index
    %384 = vector.load %arg5[%c0_116, %c255] : memref<2x512xf32, #tpu.memory_space<vmem>>, vector<2x256xf32>
    %c0_117 = arith.constant 0 : index
    %c255_118 = arith.constant 255 : index
    %385 = vector.load %arg6[%c0_117, %c255_118] : memref<2x512xf32, #tpu.memory_space<vmem>>, vector<2x256xf32>
    %386 = arith.mulf %118, %126 : vector<1x256xf32>
    %387 = vector.broadcast %41 : f32 to vector<2x256xf32>
    %388 = arith.mulf %387, %384 : vector<2x256xf32>
    %389 = vector.broadcast %90 : f32 to vector<2x256xf32>
    %390 = arith.mulf %389, %385 : vector<2x256xf32>
    %391 = arith.addf %388, %390 : vector<2x256xf32>
    %392 = vector.broadcast %386 : vector<1x256xf32> to vector<2x256xf32>
    %393 = arith.mulf %391, %392 : vector<2x256xf32>
    %394 = arith.addf %383, %393 : vector<2x256xf32>
    %c0_119 = arith.constant 0 : index
    %c0_120 = arith.constant 0 : index
    %395 = vector.load %arg5[%c0_119, %c0_120] : memref<2x512xf32, #tpu.memory_space<vmem>>, vector<2x256xf32>
    %c0_121 = arith.constant 0 : index
    %c0_122 = arith.constant 0 : index
    %396 = vector.load %arg6[%c0_121, %c0_122] : memref<2x512xf32, #tpu.memory_space<vmem>>, vector<2x256xf32>
    %397 = arith.mulf %119, %126 : vector<1x256xf32>
    %398 = vector.broadcast %42 : f32 to vector<2x256xf32>
    %399 = arith.mulf %398, %395 : vector<2x256xf32>
    %400 = vector.broadcast %91 : f32 to vector<2x256xf32>
    %401 = arith.mulf %400, %396 : vector<2x256xf32>
    %402 = arith.addf %399, %401 : vector<2x256xf32>
    %403 = vector.broadcast %397 : vector<1x256xf32> to vector<2x256xf32>
    %404 = arith.mulf %402, %403 : vector<2x256xf32>
    %405 = arith.addf %394, %404 : vector<2x256xf32>
    %c0_123 = arith.constant 0 : index
    %c1_124 = arith.constant 1 : index
    %406 = vector.load %arg5[%c0_123, %c1_124] : memref<2x512xf32, #tpu.memory_space<vmem>>, vector<2x256xf32>
    %c0_125 = arith.constant 0 : index
    %c1_126 = arith.constant 1 : index
    %407 = vector.load %arg6[%c0_125, %c1_126] : memref<2x512xf32, #tpu.memory_space<vmem>>, vector<2x256xf32>
    %408 = arith.mulf %120, %126 : vector<1x256xf32>
    %409 = vector.broadcast %43 : f32 to vector<2x256xf32>
    %410 = arith.mulf %409, %406 : vector<2x256xf32>
    %411 = vector.broadcast %92 : f32 to vector<2x256xf32>
    %412 = arith.mulf %411, %407 : vector<2x256xf32>
    %413 = arith.addf %410, %412 : vector<2x256xf32>
    %414 = vector.broadcast %408 : vector<1x256xf32> to vector<2x256xf32>
    %415 = arith.mulf %413, %414 : vector<2x256xf32>
    %416 = arith.addf %405, %415 : vector<2x256xf32>
    %c0_127 = arith.constant 0 : index
    %c2_128 = arith.constant 2 : index
    %417 = vector.load %arg5[%c0_127, %c2_128] : memref<2x512xf32, #tpu.memory_space<vmem>>, vector<2x256xf32>
    %c0_129 = arith.constant 0 : index
    %c2_130 = arith.constant 2 : index
    %418 = vector.load %arg6[%c0_129, %c2_130] : memref<2x512xf32, #tpu.memory_space<vmem>>, vector<2x256xf32>
    %419 = arith.mulf %121, %126 : vector<1x256xf32>
    %420 = vector.broadcast %44 : f32 to vector<2x256xf32>
    %421 = arith.mulf %420, %417 : vector<2x256xf32>
    %422 = vector.broadcast %93 : f32 to vector<2x256xf32>
    %423 = arith.mulf %422, %418 : vector<2x256xf32>
    %424 = arith.addf %421, %423 : vector<2x256xf32>
    %425 = vector.broadcast %419 : vector<1x256xf32> to vector<2x256xf32>
    %426 = arith.mulf %424, %425 : vector<2x256xf32>
    %427 = arith.addf %416, %426 : vector<2x256xf32>
    %c0_131 = arith.constant 0 : index
    %c3_132 = arith.constant 3 : index
    %428 = vector.load %arg5[%c0_131, %c3_132] : memref<2x512xf32, #tpu.memory_space<vmem>>, vector<2x256xf32>
    %c0_133 = arith.constant 0 : index
    %c3_134 = arith.constant 3 : index
    %429 = vector.load %arg6[%c0_133, %c3_134] : memref<2x512xf32, #tpu.memory_space<vmem>>, vector<2x256xf32>
    %430 = arith.mulf %122, %126 : vector<1x256xf32>
    %431 = vector.broadcast %45 : f32 to vector<2x256xf32>
    %432 = arith.mulf %431, %428 : vector<2x256xf32>
    %433 = vector.broadcast %94 : f32 to vector<2x256xf32>
    %434 = arith.mulf %433, %429 : vector<2x256xf32>
    %435 = arith.addf %432, %434 : vector<2x256xf32>
    %436 = vector.broadcast %430 : vector<1x256xf32> to vector<2x256xf32>
    %437 = arith.mulf %435, %436 : vector<2x256xf32>
    %438 = arith.addf %427, %437 : vector<2x256xf32>
    %c0_135 = arith.constant 0 : index
    %c13_136 = arith.constant 13 : index
    %439 = vector.load %arg5[%c0_135, %c13_136] : memref<2x512xf32, #tpu.memory_space<vmem>>, vector<2x256xf32>
    %c0_137 = arith.constant 0 : index
    %c13_138 = arith.constant 13 : index
    %440 = vector.load %arg6[%c0_137, %c13_138] : memref<2x512xf32, #tpu.memory_space<vmem>>, vector<2x256xf32>
    %441 = arith.mulf %116, %127 : vector<1x256xf32>
    %442 = vector.broadcast %46 : f32 to vector<2x256xf32>
    %443 = arith.mulf %442, %439 : vector<2x256xf32>
    %444 = vector.broadcast %95 : f32 to vector<2x256xf32>
    %445 = arith.mulf %444, %440 : vector<2x256xf32>
    %446 = arith.addf %443, %445 : vector<2x256xf32>
    %447 = vector.broadcast %441 : vector<1x256xf32> to vector<2x256xf32>
    %448 = arith.mulf %446, %447 : vector<2x256xf32>
    %449 = arith.addf %438, %448 : vector<2x256xf32>
    %c0_139 = arith.constant 0 : index
    %c14_140 = arith.constant 14 : index
    %450 = vector.load %arg5[%c0_139, %c14_140] : memref<2x512xf32, #tpu.memory_space<vmem>>, vector<2x256xf32>
    %c0_141 = arith.constant 0 : index
    %c14_142 = arith.constant 14 : index
    %451 = vector.load %arg6[%c0_141, %c14_142] : memref<2x512xf32, #tpu.memory_space<vmem>>, vector<2x256xf32>
    %452 = arith.mulf %117, %127 : vector<1x256xf32>
    %453 = vector.broadcast %47 : f32 to vector<2x256xf32>
    %454 = arith.mulf %453, %450 : vector<2x256xf32>
    %455 = vector.broadcast %96 : f32 to vector<2x256xf32>
    %456 = arith.mulf %455, %451 : vector<2x256xf32>
    %457 = arith.addf %454, %456 : vector<2x256xf32>
    %458 = vector.broadcast %452 : vector<1x256xf32> to vector<2x256xf32>
    %459 = arith.mulf %457, %458 : vector<2x256xf32>
    %460 = arith.addf %449, %459 : vector<2x256xf32>
    %c0_143 = arith.constant 0 : index
    %c15_144 = arith.constant 15 : index
    %461 = vector.load %arg5[%c0_143, %c15_144] : memref<2x512xf32, #tpu.memory_space<vmem>>, vector<2x256xf32>
    %c0_145 = arith.constant 0 : index
    %c15_146 = arith.constant 15 : index
    %462 = vector.load %arg6[%c0_145, %c15_146] : memref<2x512xf32, #tpu.memory_space<vmem>>, vector<2x256xf32>
    %463 = arith.mulf %118, %127 : vector<1x256xf32>
    %464 = vector.broadcast %48 : f32 to vector<2x256xf32>
    %465 = arith.mulf %464, %461 : vector<2x256xf32>
    %466 = vector.broadcast %97 : f32 to vector<2x256xf32>
    %467 = arith.mulf %466, %462 : vector<2x256xf32>
    %468 = arith.addf %465, %467 : vector<2x256xf32>
    %469 = vector.broadcast %463 : vector<1x256xf32> to vector<2x256xf32>
    %470 = arith.mulf %468, %469 : vector<2x256xf32>
    %471 = arith.addf %460, %470 : vector<2x256xf32>
    %c0_147 = arith.constant 0 : index
    %c16_148 = arith.constant 16 : index
    %472 = vector.load %arg5[%c0_147, %c16_148] : memref<2x512xf32, #tpu.memory_space<vmem>>, vector<2x256xf32>
    %c0_149 = arith.constant 0 : index
    %c16_150 = arith.constant 16 : index
    %473 = vector.load %arg6[%c0_149, %c16_150] : memref<2x512xf32, #tpu.memory_space<vmem>>, vector<2x256xf32>
    %474 = arith.mulf %119, %127 : vector<1x256xf32>
    %475 = vector.broadcast %49 : f32 to vector<2x256xf32>
    %476 = arith.mulf %475, %472 : vector<2x256xf32>
    %477 = vector.broadcast %98 : f32 to vector<2x256xf32>
    %478 = arith.mulf %477, %473 : vector<2x256xf32>
    %479 = arith.addf %476, %478 : vector<2x256xf32>
    %480 = vector.broadcast %474 : vector<1x256xf32> to vector<2x256xf32>
    %481 = arith.mulf %479, %480 : vector<2x256xf32>
    %482 = arith.addf %471, %481 : vector<2x256xf32>
    %c0_151 = arith.constant 0 : index
    %c17_152 = arith.constant 17 : index
    %483 = vector.load %arg5[%c0_151, %c17_152] : memref<2x512xf32, #tpu.memory_space<vmem>>, vector<2x256xf32>
    %c0_153 = arith.constant 0 : index
    %c17_154 = arith.constant 17 : index
    %484 = vector.load %arg6[%c0_153, %c17_154] : memref<2x512xf32, #tpu.memory_space<vmem>>, vector<2x256xf32>
    %485 = arith.mulf %120, %127 : vector<1x256xf32>
    %486 = vector.broadcast %50 : f32 to vector<2x256xf32>
    %487 = arith.mulf %486, %483 : vector<2x256xf32>
    %488 = vector.broadcast %99 : f32 to vector<2x256xf32>
    %489 = arith.mulf %488, %484 : vector<2x256xf32>
    %490 = arith.addf %487, %489 : vector<2x256xf32>
    %491 = vector.broadcast %485 : vector<1x256xf32> to vector<2x256xf32>
    %492 = arith.mulf %490, %491 : vector<2x256xf32>
    %493 = arith.addf %482, %492 : vector<2x256xf32>
    %c0_155 = arith.constant 0 : index
    %c18_156 = arith.constant 18 : index
    %494 = vector.load %arg5[%c0_155, %c18_156] : memref<2x512xf32, #tpu.memory_space<vmem>>, vector<2x256xf32>
    %c0_157 = arith.constant 0 : index
    %c18_158 = arith.constant 18 : index
    %495 = vector.load %arg6[%c0_157, %c18_158] : memref<2x512xf32, #tpu.memory_space<vmem>>, vector<2x256xf32>
    %496 = arith.mulf %121, %127 : vector<1x256xf32>
    %497 = vector.broadcast %51 : f32 to vector<2x256xf32>
    %498 = arith.mulf %497, %494 : vector<2x256xf32>
    %499 = vector.broadcast %100 : f32 to vector<2x256xf32>
    %500 = arith.mulf %499, %495 : vector<2x256xf32>
    %501 = arith.addf %498, %500 : vector<2x256xf32>
    %502 = vector.broadcast %496 : vector<1x256xf32> to vector<2x256xf32>
    %503 = arith.mulf %501, %502 : vector<2x256xf32>
    %504 = arith.addf %493, %503 : vector<2x256xf32>
    %c0_159 = arith.constant 0 : index
    %c19_160 = arith.constant 19 : index
    %505 = vector.load %arg5[%c0_159, %c19_160] : memref<2x512xf32, #tpu.memory_space<vmem>>, vector<2x256xf32>
    %c0_161 = arith.constant 0 : index
    %c19_162 = arith.constant 19 : index
    %506 = vector.load %arg6[%c0_161, %c19_162] : memref<2x512xf32, #tpu.memory_space<vmem>>, vector<2x256xf32>
    %507 = arith.mulf %122, %127 : vector<1x256xf32>
    %508 = vector.broadcast %52 : f32 to vector<2x256xf32>
    %509 = arith.mulf %508, %505 : vector<2x256xf32>
    %510 = vector.broadcast %101 : f32 to vector<2x256xf32>
    %511 = arith.mulf %510, %506 : vector<2x256xf32>
    %512 = arith.addf %509, %511 : vector<2x256xf32>
    %513 = vector.broadcast %507 : vector<1x256xf32> to vector<2x256xf32>
    %514 = arith.mulf %512, %513 : vector<2x256xf32>
    %515 = arith.addf %504, %514 : vector<2x256xf32>
    %c0_163 = arith.constant 0 : index
    %c29_164 = arith.constant 29 : index
    %516 = vector.load %arg5[%c0_163, %c29_164] : memref<2x512xf32, #tpu.memory_space<vmem>>, vector<2x256xf32>
    %c0_165 = arith.constant 0 : index
    %c29_166 = arith.constant 29 : index
    %517 = vector.load %arg6[%c0_165, %c29_166] : memref<2x512xf32, #tpu.memory_space<vmem>>, vector<2x256xf32>
    %518 = arith.mulf %116, %128 : vector<1x256xf32>
    %519 = vector.broadcast %53 : f32 to vector<2x256xf32>
    %520 = arith.mulf %519, %516 : vector<2x256xf32>
    %521 = vector.broadcast %102 : f32 to vector<2x256xf32>
    %522 = arith.mulf %521, %517 : vector<2x256xf32>
    %523 = arith.addf %520, %522 : vector<2x256xf32>
    %524 = vector.broadcast %518 : vector<1x256xf32> to vector<2x256xf32>
    %525 = arith.mulf %523, %524 : vector<2x256xf32>
    %526 = arith.addf %515, %525 : vector<2x256xf32>
    %c0_167 = arith.constant 0 : index
    %c30_168 = arith.constant 30 : index
    %527 = vector.load %arg5[%c0_167, %c30_168] : memref<2x512xf32, #tpu.memory_space<vmem>>, vector<2x256xf32>
    %c0_169 = arith.constant 0 : index
    %c30_170 = arith.constant 30 : index
    %528 = vector.load %arg6[%c0_169, %c30_170] : memref<2x512xf32, #tpu.memory_space<vmem>>, vector<2x256xf32>
    %529 = arith.mulf %117, %128 : vector<1x256xf32>
    %530 = vector.broadcast %54 : f32 to vector<2x256xf32>
    %531 = arith.mulf %530, %527 : vector<2x256xf32>
    %532 = vector.broadcast %103 : f32 to vector<2x256xf32>
    %533 = arith.mulf %532, %528 : vector<2x256xf32>
    %534 = arith.addf %531, %533 : vector<2x256xf32>
    %535 = vector.broadcast %529 : vector<1x256xf32> to vector<2x256xf32>
    %536 = arith.mulf %534, %535 : vector<2x256xf32>
    %537 = arith.addf %526, %536 : vector<2x256xf32>
    %c0_171 = arith.constant 0 : index
    %c31_172 = arith.constant 31 : index
    %538 = vector.load %arg5[%c0_171, %c31_172] : memref<2x512xf32, #tpu.memory_space<vmem>>, vector<2x256xf32>
    %c0_173 = arith.constant 0 : index
    %c31_174 = arith.constant 31 : index
    %539 = vector.load %arg6[%c0_173, %c31_174] : memref<2x512xf32, #tpu.memory_space<vmem>>, vector<2x256xf32>
    %540 = arith.mulf %118, %128 : vector<1x256xf32>
    %541 = vector.broadcast %55 : f32 to vector<2x256xf32>
    %542 = arith.mulf %541, %538 : vector<2x256xf32>
    %543 = vector.broadcast %104 : f32 to vector<2x256xf32>
    %544 = arith.mulf %543, %539 : vector<2x256xf32>
    %545 = arith.addf %542, %544 : vector<2x256xf32>
    %546 = vector.broadcast %540 : vector<1x256xf32> to vector<2x256xf32>
    %547 = arith.mulf %545, %546 : vector<2x256xf32>
    %548 = arith.addf %537, %547 : vector<2x256xf32>
    %c0_175 = arith.constant 0 : index
    %c32_176 = arith.constant 32 : index
    %549 = vector.load %arg5[%c0_175, %c32_176] : memref<2x512xf32, #tpu.memory_space<vmem>>, vector<2x256xf32>
    %c0_177 = arith.constant 0 : index
    %c32_178 = arith.constant 32 : index
    %550 = vector.load %arg6[%c0_177, %c32_178] : memref<2x512xf32, #tpu.memory_space<vmem>>, vector<2x256xf32>
    %551 = arith.mulf %119, %128 : vector<1x256xf32>
    %552 = vector.broadcast %56 : f32 to vector<2x256xf32>
    %553 = arith.mulf %552, %549 : vector<2x256xf32>
    %554 = vector.broadcast %105 : f32 to vector<2x256xf32>
    %555 = arith.mulf %554, %550 : vector<2x256xf32>
    %556 = arith.addf %553, %555 : vector<2x256xf32>
    %557 = vector.broadcast %551 : vector<1x256xf32> to vector<2x256xf32>
    %558 = arith.mulf %556, %557 : vector<2x256xf32>
    %559 = arith.addf %548, %558 : vector<2x256xf32>
    %c0_179 = arith.constant 0 : index
    %c33_180 = arith.constant 33 : index
    %560 = vector.load %arg5[%c0_179, %c33_180] : memref<2x512xf32, #tpu.memory_space<vmem>>, vector<2x256xf32>
    %c0_181 = arith.constant 0 : index
    %c33_182 = arith.constant 33 : index
    %561 = vector.load %arg6[%c0_181, %c33_182] : memref<2x512xf32, #tpu.memory_space<vmem>>, vector<2x256xf32>
    %562 = arith.mulf %120, %128 : vector<1x256xf32>
    %563 = vector.broadcast %57 : f32 to vector<2x256xf32>
    %564 = arith.mulf %563, %560 : vector<2x256xf32>
    %565 = vector.broadcast %106 : f32 to vector<2x256xf32>
    %566 = arith.mulf %565, %561 : vector<2x256xf32>
    %567 = arith.addf %564, %566 : vector<2x256xf32>
    %568 = vector.broadcast %562 : vector<1x256xf32> to vector<2x256xf32>
    %569 = arith.mulf %567, %568 : vector<2x256xf32>
    %570 = arith.addf %559, %569 : vector<2x256xf32>
    %c0_183 = arith.constant 0 : index
    %c34_184 = arith.constant 34 : index
    %571 = vector.load %arg5[%c0_183, %c34_184] : memref<2x512xf32, #tpu.memory_space<vmem>>, vector<2x256xf32>
    %c0_185 = arith.constant 0 : index
    %c34_186 = arith.constant 34 : index
    %572 = vector.load %arg6[%c0_185, %c34_186] : memref<2x512xf32, #tpu.memory_space<vmem>>, vector<2x256xf32>
    %573 = arith.mulf %121, %128 : vector<1x256xf32>
    %574 = vector.broadcast %58 : f32 to vector<2x256xf32>
    %575 = arith.mulf %574, %571 : vector<2x256xf32>
    %576 = vector.broadcast %107 : f32 to vector<2x256xf32>
    %577 = arith.mulf %576, %572 : vector<2x256xf32>
    %578 = arith.addf %575, %577 : vector<2x256xf32>
    %579 = vector.broadcast %573 : vector<1x256xf32> to vector<2x256xf32>
    %580 = arith.mulf %578, %579 : vector<2x256xf32>
    %581 = arith.addf %570, %580 : vector<2x256xf32>
    %c0_187 = arith.constant 0 : index
    %c35_188 = arith.constant 35 : index
    %582 = vector.load %arg5[%c0_187, %c35_188] : memref<2x512xf32, #tpu.memory_space<vmem>>, vector<2x256xf32>
    %c0_189 = arith.constant 0 : index
    %c35_190 = arith.constant 35 : index
    %583 = vector.load %arg6[%c0_189, %c35_190] : memref<2x512xf32, #tpu.memory_space<vmem>>, vector<2x256xf32>
    %584 = arith.mulf %122, %128 : vector<1x256xf32>
    %585 = vector.broadcast %59 : f32 to vector<2x256xf32>
    %586 = arith.mulf %585, %582 : vector<2x256xf32>
    %587 = vector.broadcast %108 : f32 to vector<2x256xf32>
    %588 = arith.mulf %587, %583 : vector<2x256xf32>
    %589 = arith.addf %586, %588 : vector<2x256xf32>
    %590 = vector.broadcast %584 : vector<1x256xf32> to vector<2x256xf32>
    %591 = arith.mulf %589, %590 : vector<2x256xf32>
    %592 = arith.addf %581, %591 : vector<2x256xf32>
    %c0_191 = arith.constant 0 : index
    %c45_192 = arith.constant 45 : index
    %593 = vector.load %arg5[%c0_191, %c45_192] : memref<2x512xf32, #tpu.memory_space<vmem>>, vector<2x256xf32>
    %c0_193 = arith.constant 0 : index
    %c45_194 = arith.constant 45 : index
    %594 = vector.load %arg6[%c0_193, %c45_194] : memref<2x512xf32, #tpu.memory_space<vmem>>, vector<2x256xf32>
    %595 = arith.mulf %116, %129 : vector<1x256xf32>
    %596 = vector.broadcast %60 : f32 to vector<2x256xf32>
    %597 = arith.mulf %596, %593 : vector<2x256xf32>
    %598 = vector.broadcast %109 : f32 to vector<2x256xf32>
    %599 = arith.mulf %598, %594 : vector<2x256xf32>
    %600 = arith.addf %597, %599 : vector<2x256xf32>
    %601 = vector.broadcast %595 : vector<1x256xf32> to vector<2x256xf32>
    %602 = arith.mulf %600, %601 : vector<2x256xf32>
    %603 = arith.addf %592, %602 : vector<2x256xf32>
    %c0_195 = arith.constant 0 : index
    %c46_196 = arith.constant 46 : index
    %604 = vector.load %arg5[%c0_195, %c46_196] : memref<2x512xf32, #tpu.memory_space<vmem>>, vector<2x256xf32>
    %c0_197 = arith.constant 0 : index
    %c46_198 = arith.constant 46 : index
    %605 = vector.load %arg6[%c0_197, %c46_198] : memref<2x512xf32, #tpu.memory_space<vmem>>, vector<2x256xf32>
    %606 = arith.mulf %117, %129 : vector<1x256xf32>
    %607 = vector.broadcast %61 : f32 to vector<2x256xf32>
    %608 = arith.mulf %607, %604 : vector<2x256xf32>
    %609 = vector.broadcast %110 : f32 to vector<2x256xf32>
    %610 = arith.mulf %609, %605 : vector<2x256xf32>
    %611 = arith.addf %608, %610 : vector<2x256xf32>
    %612 = vector.broadcast %606 : vector<1x256xf32> to vector<2x256xf32>
    %613 = arith.mulf %611, %612 : vector<2x256xf32>
    %614 = arith.addf %603, %613 : vector<2x256xf32>
    %c0_199 = arith.constant 0 : index
    %c47_200 = arith.constant 47 : index
    %615 = vector.load %arg5[%c0_199, %c47_200] : memref<2x512xf32, #tpu.memory_space<vmem>>, vector<2x256xf32>
    %c0_201 = arith.constant 0 : index
    %c47_202 = arith.constant 47 : index
    %616 = vector.load %arg6[%c0_201, %c47_202] : memref<2x512xf32, #tpu.memory_space<vmem>>, vector<2x256xf32>
    %617 = arith.mulf %118, %129 : vector<1x256xf32>
    %618 = vector.broadcast %62 : f32 to vector<2x256xf32>
    %619 = arith.mulf %618, %615 : vector<2x256xf32>
    %620 = vector.broadcast %111 : f32 to vector<2x256xf32>
    %621 = arith.mulf %620, %616 : vector<2x256xf32>
    %622 = arith.addf %619, %621 : vector<2x256xf32>
    %623 = vector.broadcast %617 : vector<1x256xf32> to vector<2x256xf32>
    %624 = arith.mulf %622, %623 : vector<2x256xf32>
    %625 = arith.addf %614, %624 : vector<2x256xf32>
    %c0_203 = arith.constant 0 : index
    %c48_204 = arith.constant 48 : index
    %626 = vector.load %arg5[%c0_203, %c48_204] : memref<2x512xf32, #tpu.memory_space<vmem>>, vector<2x256xf32>
    %c0_205 = arith.constant 0 : index
    %c48_206 = arith.constant 48 : index
    %627 = vector.load %arg6[%c0_205, %c48_206] : memref<2x512xf32, #tpu.memory_space<vmem>>, vector<2x256xf32>
    %628 = arith.mulf %119, %129 : vector<1x256xf32>
    %629 = vector.broadcast %63 : f32 to vector<2x256xf32>
    %630 = arith.mulf %629, %626 : vector<2x256xf32>
    %631 = vector.broadcast %112 : f32 to vector<2x256xf32>
    %632 = arith.mulf %631, %627 : vector<2x256xf32>
    %633 = arith.addf %630, %632 : vector<2x256xf32>
    %634 = vector.broadcast %628 : vector<1x256xf32> to vector<2x256xf32>
    %635 = arith.mulf %633, %634 : vector<2x256xf32>
    %636 = arith.addf %625, %635 : vector<2x256xf32>
    %c0_207 = arith.constant 0 : index
    %c49_208 = arith.constant 49 : index
    %637 = vector.load %arg5[%c0_207, %c49_208] : memref<2x512xf32, #tpu.memory_space<vmem>>, vector<2x256xf32>
    %c0_209 = arith.constant 0 : index
    %c49_210 = arith.constant 49 : index
    %638 = vector.load %arg6[%c0_209, %c49_210] : memref<2x512xf32, #tpu.memory_space<vmem>>, vector<2x256xf32>
    %639 = arith.mulf %120, %129 : vector<1x256xf32>
    %640 = vector.broadcast %64 : f32 to vector<2x256xf32>
    %641 = arith.mulf %640, %637 : vector<2x256xf32>
    %642 = vector.broadcast %113 : f32 to vector<2x256xf32>
    %643 = arith.mulf %642, %638 : vector<2x256xf32>
    %644 = arith.addf %641, %643 : vector<2x256xf32>
    %645 = vector.broadcast %639 : vector<1x256xf32> to vector<2x256xf32>
    %646 = arith.mulf %644, %645 : vector<2x256xf32>
    %647 = arith.addf %636, %646 : vector<2x256xf32>
    %c0_211 = arith.constant 0 : index
    %c50_212 = arith.constant 50 : index
    %648 = vector.load %arg5[%c0_211, %c50_212] : memref<2x512xf32, #tpu.memory_space<vmem>>, vector<2x256xf32>
    %c0_213 = arith.constant 0 : index
    %c50_214 = arith.constant 50 : index
    %649 = vector.load %arg6[%c0_213, %c50_214] : memref<2x512xf32, #tpu.memory_space<vmem>>, vector<2x256xf32>
    %650 = arith.mulf %121, %129 : vector<1x256xf32>
    %651 = vector.broadcast %65 : f32 to vector<2x256xf32>
    %652 = arith.mulf %651, %648 : vector<2x256xf32>
    %653 = vector.broadcast %114 : f32 to vector<2x256xf32>
    %654 = arith.mulf %653, %649 : vector<2x256xf32>
    %655 = arith.addf %652, %654 : vector<2x256xf32>
    %656 = vector.broadcast %650 : vector<1x256xf32> to vector<2x256xf32>
    %657 = arith.mulf %655, %656 : vector<2x256xf32>
    %658 = arith.addf %647, %657 : vector<2x256xf32>
    %c0_215 = arith.constant 0 : index
    %c51_216 = arith.constant 51 : index
    %659 = vector.load %arg5[%c0_215, %c51_216] : memref<2x512xf32, #tpu.memory_space<vmem>>, vector<2x256xf32>
    %c0_217 = arith.constant 0 : index
    %c51_218 = arith.constant 51 : index
    %660 = vector.load %arg6[%c0_217, %c51_218] : memref<2x512xf32, #tpu.memory_space<vmem>>, vector<2x256xf32>
    %661 = arith.mulf %122, %129 : vector<1x256xf32>
    %662 = vector.broadcast %66 : f32 to vector<2x256xf32>
    %663 = arith.mulf %662, %659 : vector<2x256xf32>
    %664 = vector.broadcast %115 : f32 to vector<2x256xf32>
    %665 = arith.mulf %664, %660 : vector<2x256xf32>
    %666 = arith.addf %663, %665 : vector<2x256xf32>
    %667 = vector.broadcast %661 : vector<1x256xf32> to vector<2x256xf32>
    %668 = arith.mulf %666, %667 : vector<2x256xf32>
    %669 = arith.addf %658, %668 : vector<2x256xf32>
    %670 = arith.negf %669 : vector<2x256xf32>
    %671 = math.exp %670 : vector<2x256xf32>
    %cst_219 = arith.constant 1.000000e+00 : f32
    %672 = vector.broadcast %cst_219 : f32 to vector<2x256xf32>
    %673 = arith.addf %672, %671 : vector<2x256xf32>
    %674 = arith.divf %672, %673 : vector<2x256xf32>
    %c0_220 = arith.constant 0 : index
    %c0_221 = arith.constant 0 : index
    %c0_222 = arith.constant 0 : index
    %675 = vector.load %arg4[%c0_220, %c0_221, %c0_222] : memref<2x1x256xf32, #tpu.memory_space<vmem>>, vector<2x1x256xf32>
    %676 = vector.shape_cast %675 : vector<2x1x256xf32> to vector<2x256xf32>
    %677 = vector.shape_cast %674 : vector<2x256xf32> to vector<2x1x256xf32>
    tpu.vector_store %arg4[%c0_220, %c0_221, %c0_222], %677 {strides = array<i32>} : memref<2x1x256xf32, #tpu.memory_space<vmem>>, vector<2x1x256xf32>,
    return
  }
  func.func @transform_0(%arg0: i32) -> i32 {
    %c0_i32 = arith.constant 0 : i32
    %c0_i32_0 = arith.constant 0 : i32
    return %c0_i32 : i32
  }
  func.func @transform_1(%arg0: i32) -> (i32, i32) {
    %c0_i32 = arith.constant 0 : i32
    %c0_i32_0 = arith.constant 0 : i32
    %c0_i32_1 = arith.constant 0 : i32
    return %c0_i32, %c0_i32_0 : i32, i32
  }
  func.func @transform_2(%arg0: i32) -> (i32, i32, i32) {
    %c0_i32 = arith.constant 0 : i32
    %c0_i32_0 = arith.constant 0 : i32
    %c0_i32_1 = arith.constant 0 : i32
    return %arg0, %c0_i32, %c0_i32_0 : i32, i32, i32
  }
  func.func @transform_3(%arg0: i32) -> (i32, i32, i32) {
    %c0_i32 = arith.constant 0 : i32
    %c0_i32_0 = arith.constant 0 : i32
    %c0_i32_1 = arith.constant 0 : i32
    return %arg0, %c0_i32, %c0_i32_0 : i32, i32, i32
  }
}

</mosaic_0001>

<llo_original>
// kernel: tpu_custom_call.1
$region0: #{tpu_custom_call.1}
  #allocation0 [shape = 'u32[]', space=smem, size = 0x4, offset = 0x4, fixed_abs, tag = 'smem constant byte address 0x4 - core index']
  #allocation1 [shape = 'u32[72,128]{1,0:T(1,128)}', space=vmem, size = 0x9000, scoped, tag = 'internal scratch']
  #allocation2 [shape = 'f32[2,512]{1,0:T(2,128)}', space=vmem, size = 0x1000, scoped, tag = 'scratch operand']
  #allocation3 [shape = 'f32[2,512]{1,0:T(2,128)}', space=vmem, size = 0x1000, scoped, tag = 'scratch operand']
  %s0 = inlined_call_operand.hbm [shape: f32[98], index: 0, kind: input, shape index: {}]
  %s1 = inlined_call_operand.hbm [shape: f32[14,256], index: 1, kind: input, shape index: {}]
  %s2 = inlined_call_operand.hbm [shape: f32[2,4,256], index: 2, kind: input, shape index: {}]
  %s3 = inlined_call_operand.hbm [shape: f32[2,1,256], index: 3, kind: output, shape index: {}]
  %s4 = sld [smem:[#allocation0]]
  $region34: #{tpu_custom_call.1} parent=0
    _
  %s6 = ssub.s32 1, %s4
  %s7 = scalar_select 0, %s6, %s4
  $region1: #{tpu_custom_call.1} parent=0
    #allocation4 [shape = 'u8[512]{0}', space=smem, size = 0x200, scoped, tag = 'input window, operand 0, single buffered']
    #allocation5 [shape = 's32[1]{0}', space=sflag, size = 0x4, scoped, tag = 'scoped memory for tpu_custom_call.1']
    #allocation6 [shape = 's32[1]{0}', space=sflag, size = 0x4, scoped, tag = 'scoped memory for tpu_custom_call.1']
    #allocation7 [shape = 's32[1]{0}', space=sflag, size = 0x4, scoped, tag = 'scoped memory for tpu_custom_call.1']
    #allocation8 [shape = 'u8[16384]{0}', space=vmem, size = 0x4000, scoped, tag = 'input window, operand 1, single buffered']
    #allocation9 [shape = 'u8[8192]{0}', space=vmem, size = 0x2000, scoped, tag = 'input window, operand 2, single buffered']
    #allocation10 [shape = 's32[1]{0}', space=sflag, size = 0x4, scoped, tag = 'scoped memory for tpu_custom_call.1']
    #allocation11 [shape = 'u8[2048]{0}', space=vmem, size = 0x800, scoped, tag = 'output window, operand 0, single buffered']
    %8 = vsyncpa [#allocation7], 0
    %9 = vsyncpa [#allocation5], 0
    %10 = vsyncpa [#allocation10], 0
    %11 = vsyncpa [#allocation6], 0
    // Predicated region
    $region2: #{tpu_custom_call.1} parent=1 // pred_check
      _
    $region3: #{tpu_custom_call.1} parent=1 // pred_check_branch
      %13 = sbr.rel (0) target = $region5
    $region4: #{tpu_custom_call.1} parent=1 // pred_region
      %15 = vsyncadd [#allocation7], 0
      %s17 = sshll.u32 %s0, 4
      %s18 = int_to_ptr.hbm [resolvable:$true] %s17
      %20 = dma.hbm_to_smem %s18, 16, [#allocation4], [#allocation7]
    $region5: #{tpu_custom_call.1} parent=1 // pred_fallthru
      _
    // Predicated region
    $region6: #{tpu_custom_call.1} parent=1 // pred_check
      _
    $region7: #{tpu_custom_call.1} parent=1 // pred_check_branch
      %22 = sbr.rel (0) target = $region9
    $region8: #{tpu_custom_call.1} parent=1 // pred_region
      %24 = vsyncadd [#allocation5], 0
      %s25 = sshll.u32 %s1, 4
      %s26 = int_to_ptr.hbm [resolvable:$true] %s25
      %s27 = sshll.u32 [#allocation8], 4
      %s28 = int_to_ptr.vmem [resolvable:$true] %s27
      %33 = dma.hbm_to_vmem [thread:$0]  %s26, 512, %s28, [#allocation5], 256, 256, 16
    $region9: #{tpu_custom_call.1} parent=1 // pred_fallthru
      _
    // Predicated region
    $region10: #{tpu_custom_call.1} parent=1 // pred_check
      _
    $region11: #{tpu_custom_call.1} parent=1 // pred_check_branch
      %35 = sbr.rel (0) target = $region13
    $region12: #{tpu_custom_call.1} parent=1 // pred_region
      %37 = vsyncadd [#allocation10], 0
      %s38 = sshll.u32 %s2, 4
      %s39 = int_to_ptr.hbm [resolvable:$true] %s38
      %s40 = sshll.u32 [#allocation9], 4
      %s41 = int_to_ptr.vmem [resolvable:$true] %s40
      %46 = dma.hbm_to_vmem [thread:$0]  %s39, 256, %s41, [#allocation10], 128, 128, 8
    $region13: #{tpu_custom_call.1} parent=1 // pred_fallthru
      _
    // Predicated region
    $region14: #{tpu_custom_call.1} parent=1 // pred_check
      _
    $region15: #{tpu_custom_call.1} parent=1 // pred_check_branch
      %48 = sbr.rel (0) target = $region17
    $region16: #{tpu_custom_call.1} parent=1 // pred_region
      %50 = dma.done [#allocation7], 16
    $region17: #{tpu_custom_call.1} parent=1 // pred_fallthru
      _
    // Predicated region
    $region18: #{tpu_custom_call.1} parent=1 // pred_check
      _
    $region19: #{tpu_custom_call.1} parent=1 // pred_check_branch
      %52 = sbr.rel (0) target = $region21
    $region20: #{tpu_custom_call.1} parent=1 // pred_region
      %54 = dma.done [#allocation5], 512
    $region21: #{tpu_custom_call.1} parent=1 // pred_fallthru
      _
    // Predicated region
    $region22: #{tpu_custom_call.1} parent=1 // pred_check
      _
    $region23: #{tpu_custom_call.1} parent=1 // pred_check_branch
      %56 = sbr.rel (0) target = $region25
    $region24: #{tpu_custom_call.1} parent=1 // pred_region
      %58 = dma.done [#allocation10], 256
    $region25: #{tpu_custom_call.1} parent=1 // pred_fallthru
      _
    %59 = sfence
    %v60 = vld [vmem:[#allocation9] ss:$4 sm:$0x3]
    %s61 = scalar_lea.vmem [#allocation9], 8
    %v62 = vld [vmem:[%s61] ss:$4 sm:$0x3]
    %s63 = scalar_lea.vmem [#allocation9], 1
    %v64 = vld [vmem:[%s63] ss:$4 sm:$0x3]
    %s65 = scalar_lea.vmem [#allocation9], 9
    %v66 = vld [vmem:[%s65] ss:$4 sm:$0x3]
    %v67 = vadd.f32 %v60, %v64
    %v68 = vadd.f32 %v62, %v66
    %v69 = vmax.f32 %v60, %v64
    %v70 = vmax.f32 %v62, %v66
    %s71 = scalar_lea.vmem [#allocation9], 2
    %v72 = vld [vmem:[%s71] ss:$4 sm:$0x3]
    %s73 = scalar_lea.vmem [#allocation9], 10
    %v74 = vld [vmem:[%s73] ss:$4 sm:$0x3]
    %v75 = vadd.f32 %v67, %v72
    %v76 = vadd.f32 %v68, %v74
    %v77 = vmax.f32 %v69, %v72
    %v78 = vmax.f32 %v70, %v74
    %s79 = scalar_lea.vmem [#allocation9], 3
    %v80 = vld [vmem:[%s79] ss:$4 sm:$0x3]
    %s81 = scalar_lea.vmem [#allocation9], 11
    %v82 = vld [vmem:[%s81] ss:$4 sm:$0x3]
    %v83 = vadd.f32 %v75, %v80
    %v84 = vadd.f32 %v76, %v82
    %v85 = vmax.f32 %v77, %v80
    %v86 = vmax.f32 %v78, %v82
    %89 = vst [vmem:[#allocation1] ss:$2 sm:$0xff] %v83
    %s90 = scalar_lea.vmem [#allocation1], 1
    %91 = vst [vmem:[%s90] ss:$2 sm:$0xff] %v84
    %v92 = vld [vmem:[#allocation1] sm:$0xff]
    %94 = vst [vmem:[#allocation2] sm:$0xf] %v92
    %95 = vst [vmem:[#allocation1] ss:$2 sm:$0xff] %v83
    %s96 = scalar_lea.vmem [#allocation1], 1
    %97 = vst [vmem:[%s96] ss:$2 sm:$0xff] %v84
    %v98 = vld [vmem:[#allocation1] sm:$0xff]
    %100 = vst [vmem:[#allocation2 + $0x4] sm:$0xf] %v98
    %103 = vst [vmem:[#allocation1] ss:$2 sm:$0xff] %v85
    %s104 = scalar_lea.vmem [#allocation1], 1
    %105 = vst [vmem:[%s104] ss:$2 sm:$0xff] %v86
    %v106 = vld [vmem:[#allocation1] sm:$0xff]
    %108 = vst [vmem:[#allocation3] sm:$0xf] %v106
    %109 = vst [vmem:[#allocation1] ss:$2 sm:$0xff] %v85
    %s110 = scalar_lea.vmem [#allocation1], 1
    %111 = vst [vmem:[%s110] ss:$2 sm:$0xff] %v86
    %v112 = vld [vmem:[#allocation1] sm:$0xff]
    %114 = vst [vmem:[#allocation3 + $0x4] sm:$0xf] %v112
    %s115 = sld [smem:[#allocation4]]
    %s116 = sld [smem:[#allocation4 + $0x1]]
    %s117 = sld [smem:[#allocation4 + $0x2]]
    %s118 = sld [smem:[#allocation4 + $0x3]]
    %s119 = sld [smem:[#allocation4 + $0x4]]
    %s120 = sld [smem:[#allocation4 + $0x5]]
    %s121 = sld [smem:[#allocation4 + $0x6]]
    %s122 = sld [smem:[#allocation4 + $0x7]]
    %s123 = sld [smem:[#allocation4 + $0x8]]
    %s124 = sld [smem:[#allocation4 + $0x9]]
    %s125 = sld [smem:[#allocation4 + $0xa]]
    %s126 = sld [smem:[#allocation4 + $0xb]]
    %s127 = sld [smem:[#allocation4 + $0xc]]
    %s128 = sld [smem:[#allocation4 + $0xd]]
    %s129 = sld [smem:[#allocation4 + $0xe]]
    %s130 = sld [smem:[#allocation4 + $0xf]]
    %s131 = sld [smem:[#allocation4 + $0x10]]
    %s132 = sld [smem:[#allocation4 + $0x11]]
    %s133 = sld [smem:[#allocation4 + $0x12]]
    %s134 = sld [smem:[#allocation4 + $0x13]]
    %s135 = sld [smem:[#allocation4 + $0x14]]
    %s136 = sld [smem:[#allocation4 + $0x15]]
    %s137 = sld [smem:[#allocation4 + $0x16]]
    %s138 = sld [smem:[#allocation4 + $0x17]]
    %s139 = sld [smem:[#allocation4 + $0x18]]
    %s140 = sld [smem:[#allocation4 + $0x19]]
    %s141 = sld [smem:[#allocation4 + $0x1a]]
    %s142 = sld [smem:[#allocation4 + $0x1b]]
    %s143 = sld [smem:[#allocation4 + $0x1c]]
    %s144 = sld [smem:[#allocation4 + $0x1d]]
    %s145 = sld [smem:[#allocation4 + $0x1e]]
    %s146 = sld [smem:[#allocation4 + $0x1f]]
    %s147 = sld [smem:[#allocation4 + $0x20]]
    %s148 = sld [smem:[#allocation4 + $0x21]]
    %s149 = sld [smem:[#allocation4 + $0x22]]
    %s150 = sld [smem:[#allocation4 + $0x23]]
    %s151 = sld [smem:[#allocation4 + $0x24]]
    %s152 = sld [smem:[#allocation4 + $0x25]]
    %s153 = sld [smem:[#allocation4 + $0x26]]
    %s154 = sld [smem:[#allocation4 + $0x27]]
    %s155 = sld [smem:[#allocation4 + $0x28]]
    %s156 = sld [smem:[#allocation4 + $0x29]]
    %s157 = sld [smem:[#allocation4 + $0x2a]]
    %s158 = sld [smem:[#allocation4 + $0x2b]]
    %s159 = sld [smem:[#allocation4 + $0x2c]]
    %s160 = sld [smem:[#allocation4 + $0x2d]]
    %s161 = sld [smem:[#allocation4 + $0x2e]]
    %s162 = sld [smem:[#allocation4 + $0x2f]]
    %s163 = sld [smem:[#allocation4 + $0x30]]
    %s164 = sld [smem:[#allocation4 + $0x31]]
    %s165 = sld [smem:[#allocation4 + $0x32]]
    %s166 = sld [smem:[#allocation4 + $0x33]]
    %s167 = sld [smem:[#allocation4 + $0x34]]
    %s168 = sld [smem:[#allocation4 + $0x35]]
    %s169 = sld [smem:[#allocation4 + $0x36]]
    %s170 = sld [smem:[#allocation4 + $0x37]]
    %s171 = sld [smem:[#allocation4 + $0x38]]
    %s172 = sld [smem:[#allocation4 + $0x39]]
    %s173 = sld [smem:[#allocation4 + $0x3a]]
    %s174 = sld [smem:[#allocation4 + $0x3b]]
    %s175 = sld [smem:[#allocation4 + $0x3c]]
    %s176 = sld [smem:[#allocation4 + $0x3d]]
    %s177 = sld [smem:[#allocation4 + $0x3e]]
    %s178 = sld [smem:[#allocation4 + $0x3f]]
    %s179 = sld [smem:[#allocation4 + $0x40]]
    %s180 = sld [smem:[#allocation4 + $0x41]]
    %s181 = sld [smem:[#allocation4 + $0x42]]
    %s182 = sld [smem:[#allocation4 + $0x43]]
    %s183 = sld [smem:[#allocation4 + $0x44]]
    %s184 = sld [smem:[#allocation4 + $0x45]]
    %s185 = sld [smem:[#allocation4 + $0x46]]
    %s186 = sld [smem:[#allocation4 + $0x47]]
    %s187 = sld [smem:[#allocation4 + $0x48]]
    %s188 = sld [smem:[#allocation4 + $0x49]]
    %s189 = sld [smem:[#allocation4 + $0x4a]]
    %s190 = sld [smem:[#allocation4 + $0x4b]]
    %s191 = sld [smem:[#allocation4 + $0x4c]]
    %s192 = sld [smem:[#allocation4 + $0x4d]]
    %s193 = sld [smem:[#allocation4 + $0x4e]]
    %s194 = sld [smem:[#allocation4 + $0x4f]]
    %s195 = sld [smem:[#allocation4 + $0x50]]
    %s196 = sld [smem:[#allocation4 + $0x51]]
    %s197 = sld [smem:[#allocation4 + $0x52]]
    %s198 = sld [smem:[#allocation4 + $0x53]]
    %s199 = sld [smem:[#allocation4 + $0x54]]
    %s200 = sld [smem:[#allocation4 + $0x55]]
    %s201 = sld [smem:[#allocation4 + $0x56]]
    %s202 = sld [smem:[#allocation4 + $0x57]]
    %s203 = sld [smem:[#allocation4 + $0x58]]
    %s204 = sld [smem:[#allocation4 + $0x59]]
    %s205 = sld [smem:[#allocation4 + $0x5a]]
    %s206 = sld [smem:[#allocation4 + $0x5b]]
    %s207 = sld [smem:[#allocation4 + $0x5c]]
    %s208 = sld [smem:[#allocation4 + $0x5d]]
    %s209 = sld [smem:[#allocation4 + $0x5e]]
    %s210 = sld [smem:[#allocation4 + $0x5f]]
    %s211 = sld [smem:[#allocation4 + $0x60]]
    %s212 = sld [smem:[#allocation4 + $0x61]]
    %v213 = vld [vmem:[#allocation8] ss:$8 sm:$0x3]
    %s214 = scalar_lea.vmem [#allocation8], 1
    %v215 = vld [vmem:[%s214] ss:$8 sm:$0x3]
    %s216 = scalar_lea.vmem [#allocation8], 2
    %v217 = vld [vmem:[%s216] ss:$8 sm:$0x3]
    %s218 = scalar_lea.vmem [#allocation8], 3
    %v219 = vld [vmem:[%s218] ss:$8 sm:$0x3]
    %s220 = scalar_lea.vmem [#allocation8], 4
    %v221 = vld [vmem:[%s220] ss:$8 sm:$0x3]
    %s222 = scalar_lea.vmem [#allocation8], 5
    %v223 = vld [vmem:[%s222] ss:$8 sm:$0x3]
    %s224 = scalar_lea.vmem [#allocation8], 6
    %v225 = vld [vmem:[%s224] ss:$8 sm:$0x3]
    %s226 = scalar_lea.vmem [#allocation8], 7
    %v227 = vld [vmem:[%s226] ss:$8 sm:$0x3]
    %s228 = scalar_lea.vmem [#allocation8], 16
    %v229 = vld [vmem:[%s228] ss:$8 sm:$0x3]
    %s230 = scalar_lea.vmem [#allocation8], 17
    %v231 = vld [vmem:[%s230] ss:$8 sm:$0x3]
    %s232 = scalar_lea.vmem [#allocation8], 18
    %v233 = vld [vmem:[%s232] ss:$8 sm:$0x3]
    %s234 = scalar_lea.vmem [#allocation8], 19
    %v235 = vld [vmem:[%s234] ss:$8 sm:$0x3]
    %s236 = scalar_lea.vmem [#allocation8], 20
    %v237 = vld [vmem:[%s236] ss:$8 sm:$0x3]
    %s238 = scalar_lea.vmem [#allocation8], 21
    %v239 = vld [vmem:[%s238] ss:$8 sm:$0x3]
    %v240 = vld [vmem:[#allocation2 + $0x2] sm:$0x3f]
    %v241 = vld [vmem:[#allocation3 + $0x2] sm:$0x3f]
    %v242 = vmul.f32 %v213, %v227
    %v243 = vstv %s115
    %v244 = vmul.f32 %v243, %v240
    %v245 = vstv %s164
    %v246 = vmul.f32 %v245, %v241
    %v247 = vadd.f32 %v244, %v246
    %v249 = vperm.slane %v242, 0
    %v250 = vperm.slane %v242, 1
    %v251 = vrot.slane %v250, 6
    %vm252 = vcmask 1041408
    %v253 = vsel %vm252, %v249, %v251
    %254 = vrot.lane.b32.xlu0 %v253, 77
    %v255 = vpop.permute.xlu0 %254
    %v256 = vrot.slane %v255, 6
    %vm257 = vcmask 629760
    %v258 = vsel %vm257, %v256, %v255
    %v260 = vmul.f32 %v247, %v258
    %v261 = vadd.f32 %v260, 0.0
    %v262 = vmul.f32 %v215, %v227
    %v263 = vstv %s116
    %v264 = vmul.f32 %v263, %v240
    %v265 = vstv %s165
    %v266 = vmul.f32 %v265, %v241
    %v267 = vadd.f32 %v264, %v266
    %v269 = vperm.slane %v262, 0
    %v270 = vperm.slane %v262, 1
    %v271 = vrot.slane %v270, 6
    %v272 = vsel %vm252, %v269, %v271
    %273 = vrot.lane.b32.xlu0 %v272, 78
    %v274 = vpop.permute.xlu0 %273
    %v275 = vrot.slane %v274, 6
    %vm276 = vcmask 637952
    %v277 = vsel %vm276, %v275, %v274
    %v279 = vmul.f32 %v267, %v277
    %281 = vrot.lane.b32.xlu0 %v279, 127
    %v282 = vpop.permute.xlu0 %281
    %v283 = vrot.slane %v282, 2
    %vm284 = vcmask 1039360
    %v285 = vsel %vm284, %v282, %v283
    %v287 = vadd.f32 %v261, %v285
    %v288 = vmul.f32 %v217, %v227
    %v289 = vstv %s117
    %v290 = vmul.f32 %v289, %v240
    %v291 = vstv %s166
    %v292 = vmul.f32 %v291, %v241
    %v293 = vadd.f32 %v290, %v292
    %v295 = vperm.slane %v288, 0
    %v296 = vperm.slane %v288, 1
    %v297 = vrot.slane %v296, 6
    %v298 = vsel %vm252, %v295, %v297
    %299 = vrot.lane.b32.xlu0 %v298, 79
    %v300 = vpop.permute.xlu0 %299
    %v301 = vrot.slane %v300, 6
    %vm302 = vcmask 646144
    %v303 = vsel %vm302, %v301, %v300
    %v305 = vmul.f32 %v293, %v303
    %307 = vrot.lane.b32.xlu0 %v305, 126
    %v308 = vpop.permute.xlu0 %307
    %v309 = vrot.slane %v308, 2
    %vm310 = vcmask 1031168
    %v311 = vsel %vm310, %v308, %v309
    %v313 = vadd.f32 %v287, %v311
    %v314 = vmul.f32 %v219, %v227
    %v315 = vstv %s118
    %v316 = vmul.f32 %v315, %v240
    %v317 = vstv %s167
    %v318 = vmul.f32 %v317, %v241
    %v319 = vadd.f32 %v316, %v318
    %v321 = vperm.slane %v314, 0
    %v322 = vperm.slane %v314, 1
    %v323 = vrot.slane %v322, 6
    %v324 = vsel %vm252, %v321, %v323
    %325 = vrot.lane.b32.xlu0 %v324, 80
    %v326 = vpop.permute.xlu0 %325
    %v327 = vrot.slane %v326, 6
    %vm328 = vcmask 654336
    %v329 = vsel %vm328, %v327, %v326
    %v331 = vmul.f32 %v319, %v329
    %333 = vrot.lane.b32.xlu0 %v331, 125
    %v334 = vpop.permute.xlu0 %333
    %v335 = vrot.slane %v334, 2
    %vm336 = vcmask 1022976
    %v337 = vsel %vm336, %v334, %v335
    %v339 = vadd.f32 %v313, %v337
    %v340 = vmul.f32 %v221, %v227
    %v341 = vstv %s119
    %v342 = vmul.f32 %v341, %v240
    %v343 = vstv %s168
    %v344 = vmul.f32 %v343, %v241
    %v345 = vadd.f32 %v342, %v344
    %v347 = vperm.slane %v340, 0
    %v348 = vperm.slane %v340, 1
    %v349 = vrot.slane %v348, 6
    %v350 = vsel %vm252, %v347, %v349
    %351 = vrot.lane.b32.xlu0 %v350, 81
    %v352 = vpop.permute.xlu0 %351
    %v353 = vrot.slane %v352, 6
    %vm354 = vcmask 662528
    %v355 = vsel %vm354, %v353, %v352
    %v357 = vmul.f32 %v345, %v355
    %359 = vrot.lane.b32.xlu0 %v357, 124
    %v360 = vpop.permute.xlu0 %359
    %v361 = vrot.slane %v360, 2
    %vm362 = vcmask 1014784
    %v363 = vsel %vm362, %v360, %v361
    %v365 = vadd.f32 %v339, %v363
    %v366 = vmul.f32 %v223, %v227
    %v367 = vstv %s120
    %v368 = vmul.f32 %v367, %v240
    %v369 = vstv %s169
    %v370 = vmul.f32 %v369, %v241
    %v371 = vadd.f32 %v368, %v370
    %v373 = vperm.slane %v366, 0
    %v374 = vperm.slane %v366, 1
    %v375 = vrot.slane %v374, 6
    %v376 = vsel %vm252, %v373, %v375
    %377 = vrot.lane.b32.xlu0 %v376, 82
    %v378 = vpop.permute.xlu0 %377
    %v379 = vrot.slane %v378, 6
    %vm380 = vcmask 670720
    %v381 = vsel %vm380, %v379, %v378
    %v383 = vmul.f32 %v371, %v381
    %385 = vrot.lane.b32.xlu0 %v383, 123
    %v386 = vpop.permute.xlu0 %385
    %v387 = vrot.slane %v386, 2
    %vm388 = vcmask 1006592
    %v389 = vsel %vm388, %v386, %v387
    %v391 = vadd.f32 %v365, %v389
    %v392 = vmul.f32 %v225, %v227
    %v393 = vstv %s121
    %v394 = vmul.f32 %v393, %v240
    %v395 = vstv %s170
    %v396 = vmul.f32 %v395, %v241
    %v397 = vadd.f32 %v394, %v396
    %v399 = vperm.slane %v392, 0
    %v400 = vperm.slane %v392, 1
    %v401 = vrot.slane %v400, 6
    %v402 = vsel %vm252, %v399, %v401
    %403 = vrot.lane.b32.xlu0 %v402, 83
    %v404 = vpop.permute.xlu0 %403
    %v405 = vrot.slane %v404, 6
    %vm406 = vcmask 678912
    %v407 = vsel %vm406, %v405, %v404
    %v409 = vmul.f32 %v397, %v407
    %411 = vrot.lane.b32.xlu0 %v409, 122
    %v412 = vpop.permute.xlu0 %411
    %v413 = vrot.slane %v412, 2
    %vm414 = vcmask 998400
    %v415 = vsel %vm414, %v412, %v413
    %v417 = vadd.f32 %v391, %v415
    %v418 = vmul.f32 %v213, %v229
    %v419 = vstv %s122
    %v420 = vmul.f32 %v419, %v240
    %v421 = vstv %s171
    %v422 = vmul.f32 %v421, %v241
    %v423 = vadd.f32 %v420, %v422
    %v425 = vperm.slane %v418, 0
    %v426 = vperm.slane %v418, 1
    %v427 = vrot.slane %v426, 6
    %v428 = vsel %vm252, %v425, %v427
    %429 = vrot.lane.b32.xlu0 %v428, 93
    %v430 = vpop.permute.xlu0 %429
    %v431 = vrot.slane %v430, 6
    %vm432 = vcmask 760832
    %v433 = vsel %vm432, %v431, %v430
    %v435 = vmul.f32 %v423, %v433
    %437 = vrot.lane.b32.xlu0 %v435, 112
    %v438 = vpop.permute.xlu0 %437
    %v439 = vrot.slane %v438, 2
    %vm440 = vcmask 916480
    %v441 = vsel %vm440, %v438, %v439
    %v443 = vadd.f32 %v417, %v441
    %v444 = vmul.f32 %v215, %v229
    %v445 = vstv %s123
    %v446 = vmul.f32 %v445, %v240
    %v447 = vstv %s172
    %v448 = vmul.f32 %v447, %v241
    %v449 = vadd.f32 %v446, %v448
    %v451 = vperm.slane %v444, 0
    %v452 = vperm.slane %v444, 1
    %v453 = vrot.slane %v452, 6
    %v454 = vsel %vm252, %v451, %v453
    %455 = vrot.lane.b32.xlu0 %v454, 94
    %v456 = vpop.permute.xlu0 %455
    %v457 = vrot.slane %v456, 6
    %vm458 = vcmask 769024
    %v459 = vsel %vm458, %v457, %v456
    %v461 = vmul.f32 %v449, %v459
    %463 = vrot.lane.b32.xlu0 %v461, 111
    %v464 = vpop.permute.xlu0 %463
    %v465 = vrot.slane %v464, 2
    %vm466 = vcmask 908288
    %v467 = vsel %vm466, %v464, %v465
    %v469 = vadd.f32 %v443, %v467
    %v470 = vmul.f32 %v217, %v229
    %v471 = vstv %s124
    %v472 = vmul.f32 %v471, %v240
    %v473 = vstv %s173
    %v474 = vmul.f32 %v473, %v241
    %v475 = vadd.f32 %v472, %v474
    %v477 = vperm.slane %v470, 0
    %v478 = vperm.slane %v470, 1
    %v479 = vrot.slane %v478, 6
    %v480 = vsel %vm252, %v477, %v479
    %481 = vrot.lane.b32.xlu0 %v480, 95
    %v482 = vpop.permute.xlu0 %481
    %v483 = vrot.slane %v482, 6
    %vm484 = vcmask 777216
    %v485 = vsel %vm484, %v483, %v482
    %v487 = vmul.f32 %v475, %v485
    %489 = vrot.lane.b32.xlu0 %v487, 110
    %v490 = vpop.permute.xlu0 %489
    %v491 = vrot.slane %v490, 2
    %vm492 = vcmask 900096
    %v493 = vsel %vm492, %v490, %v491
    %v495 = vadd.f32 %v469, %v493
    %v496 = vmul.f32 %v219, %v229
    %v497 = vstv %s125
    %v498 = vmul.f32 %v497, %v240
    %v499 = vstv %s174
    %v500 = vmul.f32 %v499, %v241
    %v501 = vadd.f32 %v498, %v500
    %v503 = vperm.slane %v496, 0
    %v504 = vperm.slane %v496, 1
    %v505 = vrot.slane %v504, 6
    %v506 = vsel %vm252, %v503, %v505
    %507 = vrot.lane.b32.xlu0 %v506, 96
    %v508 = vpop.permute.xlu0 %507
    %v509 = vrot.slane %v508, 6
    %vm510 = vcmask 785408
    %v511 = vsel %vm510, %v509, %v508
    %v513 = vmul.f32 %v501, %v511
    %515 = vrot.lane.b32.xlu0 %v513, 109
    %v516 = vpop.permute.xlu0 %515
    %v517 = vrot.slane %v516, 2
    %vm518 = vcmask 891904
    %v519 = vsel %vm518, %v516, %v517
    %v521 = vadd.f32 %v495, %v519
    %v522 = vmul.f32 %v221, %v229
    %v523 = vstv %s126
    %v524 = vmul.f32 %v523, %v240
    %v525 = vstv %s175
    %v526 = vmul.f32 %v525, %v241
    %v527 = vadd.f32 %v524, %v526
    %v529 = vperm.slane %v522, 0
    %v530 = vperm.slane %v522, 1
    %v531 = vrot.slane %v530, 6
    %v532 = vsel %vm252, %v529, %v531
    %533 = vrot.lane.b32.xlu0 %v532, 97
    %v534 = vpop.permute.xlu0 %533
    %v535 = vrot.slane %v534, 6
    %vm536 = vcmask 793600
    %v537 = vsel %vm536, %v535, %v534
    %v539 = vmul.f32 %v527, %v537
    %541 = vrot.lane.b32.xlu0 %v539, 108
    %v542 = vpop.permute.xlu0 %541
    %v543 = vrot.slane %v542, 2
    %vm544 = vcmask 883712
    %v545 = vsel %vm544, %v542, %v543
    %v547 = vadd.f32 %v521, %v545
    %v548 = vmul.f32 %v223, %v229
    %v549 = vstv %s127
    %v550 = vmul.f32 %v549, %v240
    %v551 = vstv %s176
    %v552 = vmul.f32 %v551, %v241
    %v553 = vadd.f32 %v550, %v552
    %v555 = vperm.slane %v548, 0
    %v556 = vperm.slane %v548, 1
    %v557 = vrot.slane %v556, 6
    %v558 = vsel %vm252, %v555, %v557
    %559 = vrot.lane.b32.xlu0 %v558, 98
    %v560 = vpop.permute.xlu0 %559
    %v561 = vrot.slane %v560, 6
    %vm562 = vcmask 801792
    %v563 = vsel %vm562, %v561, %v560
    %v565 = vmul.f32 %v553, %v563
    %567 = vrot.lane.b32.xlu0 %v565, 107
    %v568 = vpop.permute.xlu0 %567
    %v569 = vrot.slane %v568, 2
    %vm570 = vcmask 875520
    %v571 = vsel %vm570, %v568, %v569
    %v573 = vadd.f32 %v547, %v571
    %v574 = vmul.f32 %v225, %v229
    %v575 = vstv %s128
    %v576 = vmul.f32 %v575, %v240
    %v577 = vstv %s177
    %v578 = vmul.f32 %v577, %v241
    %v579 = vadd.f32 %v576, %v578
    %v581 = vperm.slane %v574, 0
    %v582 = vperm.slane %v574, 1
    %v583 = vrot.slane %v582, 6
    %v584 = vsel %vm252, %v581, %v583
    %585 = vrot.lane.b32.xlu0 %v584, 99
    %v586 = vpop.permute.xlu0 %585
    %v587 = vrot.slane %v586, 6
    %vm588 = vcmask 809984
    %v589 = vsel %vm588, %v587, %v586
    %v591 = vmul.f32 %v579, %v589
    %593 = vrot.lane.b32.xlu0 %v591, 106
    %v594 = vpop.permute.xlu0 %593
    %v595 = vrot.slane %v594, 2
    %vm596 = vcmask 867328
    %v597 = vsel %vm596, %v594, %v595
    %v599 = vadd.f32 %v573, %v597
    %v600 = vmul.f32 %v213, %v231
    %v601 = vstv %s129
    %v602 = vmul.f32 %v601, %v240
    %v603 = vstv %s178
    %v604 = vmul.f32 %v603, %v241
    %v605 = vadd.f32 %v602, %v604
    %v607 = vperm.slane %v600, 0
    %v608 = vperm.slane %v600, 1
    %v609 = vrot.slane %v608, 6
    %v610 = vsel %vm252, %v607, %v609
    %611 = vrot.lane.b32.xlu0 %v610, 109
    %v612 = vpop.permute.xlu0 %611
    %v613 = vrot.slane %v612, 6
    %v614 = vsel %vm518, %v613, %v612
    %v616 = vmul.f32 %v605, %v614
    %618 = vrot.lane.b32.xlu0 %v616, 96
    %v619 = vpop.permute.xlu0 %618
    %v620 = vrot.slane %v619, 2
    %v621 = vsel %vm510, %v619, %v620
    %v623 = vadd.f32 %v599, %v621
    %v624 = vmul.f32 %v215, %v231
    %v625 = vstv %s130
    %v626 = vmul.f32 %v625, %v240
    %v627 = vstv %s179
    %v628 = vmul.f32 %v627, %v241
    %v629 = vadd.f32 %v626, %v628
    %v631 = vperm.slane %v624, 0
    %v632 = vperm.slane %v624, 1
    %v633 = vrot.slane %v632, 6
    %v634 = vsel %vm252, %v631, %v633
    %635 = vrot.lane.b32.xlu0 %v634, 110
    %v636 = vpop.permute.xlu0 %635
    %v637 = vrot.slane %v636, 6
    %v638 = vsel %vm492, %v637, %v636
    %v640 = vmul.f32 %v629, %v638
    %642 = vrot.lane.b32.xlu0 %v640, 95
    %v643 = vpop.permute.xlu0 %642
    %v644 = vrot.slane %v643, 2
    %v645 = vsel %vm484, %v643, %v644
    %v647 = vadd.f32 %v623, %v645
    %v648 = vmul.f32 %v217, %v231
    %v649 = vstv %s131
    %v650 = vmul.f32 %v649, %v240
    %v651 = vstv %s180
    %v652 = vmul.f32 %v651, %v241
    %v653 = vadd.f32 %v650, %v652
    %v655 = vperm.slane %v648, 0
    %v656 = vperm.slane %v648, 1
    %v657 = vrot.slane %v656, 6
    %v658 = vsel %vm252, %v655, %v657
    %659 = vrot.lane.b32.xlu0 %v658, 111
    %v660 = vpop.permute.xlu0 %659
    %v661 = vrot.slane %v660, 6
    %v662 = vsel %vm466, %v661, %v660
    %v664 = vmul.f32 %v653, %v662
    %666 = vrot.lane.b32.xlu0 %v664, 94
    %v667 = vpop.permute.xlu0 %666
    %v668 = vrot.slane %v667, 2
    %v669 = vsel %vm458, %v667, %v668
    %v671 = vadd.f32 %v647, %v669
    %v672 = vmul.f32 %v219, %v231
    %v673 = vstv %s132
    %v674 = vmul.f32 %v673, %v240
    %v675 = vstv %s181
    %v676 = vmul.f32 %v675, %v241
    %v677 = vadd.f32 %v674, %v676
    %v679 = vperm.slane %v672, 0
    %v680 = vperm.slane %v672, 1
    %v681 = vrot.slane %v680, 6
    %v682 = vsel %vm252, %v679, %v681
    %683 = vrot.lane.b32.xlu0 %v682, 112
    %v684 = vpop.permute.xlu0 %683
    %v685 = vrot.slane %v684, 6
    %v686 = vsel %vm440, %v685, %v684
    %v688 = vmul.f32 %v677, %v686
    %690 = vrot.lane.b32.xlu0 %v688, 93
    %v691 = vpop.permute.xlu0 %690
    %v692 = vrot.slane %v691, 2
    %v693 = vsel %vm432, %v691, %v692
    %v695 = vadd.f32 %v671, %v693
    %v696 = vmul.f32 %v221, %v231
    %v697 = vstv %s133
    %v698 = vmul.f32 %v697, %v240
    %v699 = vstv %s182
    %v700 = vmul.f32 %v699, %v241
    %v701 = vadd.f32 %v698, %v700
    %v703 = vperm.slane %v696, 0
    %v704 = vperm.slane %v696, 1
    %v705 = vrot.slane %v704, 6
    %v706 = vsel %vm252, %v703, %v705
    %707 = vrot.lane.b32.xlu0 %v706, 113
    %v708 = vpop.permute.xlu0 %707
    %v709 = vrot.slane %v708, 6
    %vm710 = vcmask 924672
    %v711 = vsel %vm710, %v709, %v708
    %v713 = vmul.f32 %v701, %v711
    %715 = vrot.lane.b32.xlu0 %v713, 92
    %v716 = vpop.permute.xlu0 %715
    %v717 = vrot.slane %v716, 2
    %vm718 = vcmask 752640
    %v719 = vsel %vm718, %v716, %v717
    %v721 = vadd.f32 %v695, %v719
    %v722 = vmul.f32 %v223, %v231
    %v723 = vstv %s134
    %v724 = vmul.f32 %v723, %v240
    %v725 = vstv %s183
    %v726 = vmul.f32 %v725, %v241
    %v727 = vadd.f32 %v724, %v726
    %v729 = vperm.slane %v722, 0
    %v730 = vperm.slane %v722, 1
    %v731 = vrot.slane %v730, 6
    %v732 = vsel %vm252, %v729, %v731
    %733 = vrot.lane.b32.xlu0 %v732, 114
    %v734 = vpop.permute.xlu0 %733
    %v735 = vrot.slane %v734, 6
    %vm736 = vcmask 932864
    %v737 = vsel %vm736, %v735, %v734
    %v739 = vmul.f32 %v727, %v737
    %741 = vrot.lane.b32.xlu0 %v739, 91
    %v742 = vpop.permute.xlu0 %741
    %v743 = vrot.slane %v742, 2
    %vm744 = vcmask 744448
    %v745 = vsel %vm744, %v742, %v743
    %v747 = vadd.f32 %v721, %v745
    %v748 = vmul.f32 %v225, %v231
    %v749 = vstv %s135
    %v750 = vmul.f32 %v749, %v240
    %v751 = vstv %s184
    %v752 = vmul.f32 %v751, %v241
    %v753 = vadd.f32 %v750, %v752
    %v755 = vperm.slane %v748, 0
    %v756 = vperm.slane %v748, 1
    %v757 = vrot.slane %v756, 6
    %v758 = vsel %vm252, %v755, %v757
    %759 = vrot.lane.b32.xlu0 %v758, 115
    %v760 = vpop.permute.xlu0 %759
    %v761 = vrot.slane %v760, 6
    %vm762 = vcmask 941056
    %v763 = vsel %vm762, %v761, %v760
    %v765 = vmul.f32 %v753, %v763
    %767 = vrot.lane.b32.xlu0 %v765, 90
    %v768 = vpop.permute.xlu0 %767
    %v769 = vrot.slane %v768, 2
    %vm770 = vcmask 736256
    %v771 = vsel %vm770, %v768, %v769
    %v773 = vadd.f32 %v747, %v771
    %v774 = vmul.f32 %v213, %v233
    %v775 = vstv %s136
    %v776 = vmul.f32 %v775, %v240
    %v777 = vstv %s185
    %v778 = vmul.f32 %v777, %v241
    %v779 = vadd.f32 %v776, %v778
    %v781 = vperm.slane %v774, 0
    %v782 = vperm.slane %v774, 1
    %v783 = vrot.slane %v782, 6
    %v784 = vsel %vm252, %v781, %v783
    %785 = vrot.lane.b32.xlu0 %v784, 125
    %v786 = vpop.permute.xlu0 %785
    %v787 = vrot.slane %v786, 6
    %v788 = vsel %vm336, %v787, %v786
    %v790 = vmul.f32 %v779, %v788
    %792 = vrot.lane.b32.xlu0 %v790, 80
    %v793 = vpop.permute.xlu0 %792
    %v794 = vrot.slane %v793, 2
    %v795 = vsel %vm328, %v793, %v794
    %v797 = vadd.f32 %v773, %v795
    %v798 = vmul.f32 %v215, %v233
    %v799 = vstv %s137
    %v800 = vmul.f32 %v799, %v240
    %v801 = vstv %s186
    %v802 = vmul.f32 %v801, %v241
    %v803 = vadd.f32 %v800, %v802
    %v805 = vperm.slane %v798, 0
    %v806 = vperm.slane %v798, 1
    %v807 = vrot.slane %v806, 6
    %v808 = vsel %vm252, %v805, %v807
    %809 = vrot.lane.b32.xlu0 %v808, 126
    %v810 = vpop.permute.xlu0 %809
    %v811 = vrot.slane %v810, 6
    %v812 = vsel %vm310, %v811, %v810
    %v814 = vmul.f32 %v803, %v812
    %816 = vrot.lane.b32.xlu0 %v814, 79
    %v817 = vpop.permute.xlu0 %816
    %v818 = vrot.slane %v817, 2
    %v819 = vsel %vm302, %v817, %v818
    %v821 = vadd.f32 %v797, %v819
    %v822 = vmul.f32 %v217, %v233
    %v823 = vstv %s138
    %v824 = vmul.f32 %v823, %v240
    %v825 = vstv %s187
    %v826 = vmul.f32 %v825, %v241
    %v827 = vadd.f32 %v824, %v826
    %v829 = vperm.slane %v822, 0
    %v830 = vperm.slane %v822, 1
    %v831 = vrot.slane %v830, 6
    %v832 = vsel %vm252, %v829, %v831
    %833 = vrot.lane.b32.xlu0 %v832, 127
    %v834 = vpop.permute.xlu0 %833
    %v835 = vrot.slane %v834, 6
    %v836 = vsel %vm284, %v835, %v834
    %v838 = vmul.f32 %v827, %v836
    %840 = vrot.lane.b32.xlu0 %v838, 78
    %v841 = vpop.permute.xlu0 %840
    %v842 = vrot.slane %v841, 2
    %v843 = vsel %vm276, %v841, %v842
    %v845 = vadd.f32 %v821, %v843
    %v846 = vld [vmem:[#allocation2] sm:$0xf]
    %v847 = vld [vmem:[#allocation3] sm:$0xf]
    %v848 = vmul.f32 %v219, %v233
    %v849 = vstv %s139
    %v850 = vmul.f32 %v849, %v846
    %v851 = vstv %s188
    %v852 = vmul.f32 %v851, %v847
    %v853 = vadd.f32 %v850, %v852
    %v855 = vperm.slane %v848, 0
    %v856 = vperm.slane %v848, 1
    %v857 = vrot.slane %v856, 6
    %v858 = vsel %vm252, %v855, %v857
    %v860 = vmul.f32 %v853, %v858
    %862 = vrot.lane.b32.xlu0 %v860, 77
    %v863 = vpop.permute.xlu0 %862
    %v864 = vrot.slane %v863, 6
    %v865 = vsel %vm257, %v864, %v863
    %v867 = vadd.f32 %v845, %v865
    %v868 = vld [vmem:[#allocation2] sm:$0x3f]
    %v869 = vld [vmem:[#allocation3] sm:$0x3f]
    %v870 = vmul.f32 %v221, %v233
    %v871 = vstv %s140
    %v872 = vmul.f32 %v871, %v868
    %v873 = vstv %s189
    %v874 = vmul.f32 %v873, %v869
    %v875 = vadd.f32 %v872, %v874
    %v877 = vperm.slane %v870, 0
    %v878 = vperm.slane %v870, 1
    %v879 = vrot.slane %v878, 6
    %v880 = vsel %vm252, %v877, %v879
    %881 = vrot.lane.b32.xlu0 %v880, 1
    %v882 = vpop.permute.xlu0 %881
    %v883 = vrot.slane %v882, 6
    %vm884 = vcmask 7168
    %v885 = vsel %vm884, %v883, %v882
    %v887 = vmul.f32 %v875, %v885
    %889 = vrot.lane.b32.xlu0 %v887, 76
    %v890 = vpop.permute.xlu0 %889
    %v891 = vrot.slane %v890, 6
    %vm892 = vcmask 621568
    %v893 = vsel %vm892, %v891, %v890
    %v895 = vadd.f32 %v867, %v893
    %v896 = vmul.f32 %v223, %v233
    %v897 = vstv %s141
    %v898 = vmul.f32 %v897, %v868
    %v899 = vstv %s190
    %v900 = vmul.f32 %v899, %v869
    %v901 = vadd.f32 %v898, %v900
    %v903 = vperm.slane %v896, 0
    %v904 = vperm.slane %v896, 1
    %v905 = vrot.slane %v904, 6
    %v906 = vsel %vm252, %v903, %v905
    %907 = vrot.lane.b32.xlu0 %v906, 2
    %v908 = vpop.permute.xlu0 %907
    %v909 = vrot.slane %v908, 6
    %vm910 = vcmask 15360
    %v911 = vsel %vm910, %v909, %v908
    %v913 = vmul.f32 %v901, %v911
    %915 = vrot.lane.b32.xlu0 %v913, 75
    %v916 = vpop.permute.xlu0 %915
    %v917 = vrot.slane %v916, 6
    %vm918 = vcmask 613376
    %v919 = vsel %vm918, %v917, %v916
    %v921 = vadd.f32 %v895, %v919
    %v922 = vmul.f32 %v225, %v233
    %v923 = vstv %s142
    %v924 = vmul.f32 %v923, %v868
    %v925 = vstv %s191
    %v926 = vmul.f32 %v925, %v869
    %v927 = vadd.f32 %v924, %v926
    %v929 = vperm.slane %v922, 0
    %v930 = vperm.slane %v922, 1
    %v931 = vrot.slane %v930, 6
    %v932 = vsel %vm252, %v929, %v931
    %933 = vrot.lane.b32.xlu0 %v932, 3
    %v934 = vpop.permute.xlu0 %933
    %v935 = vrot.slane %v934, 6
    %vm936 = vcmask 23552
    %v937 = vsel %vm936, %v935, %v934
    %v939 = vmul.f32 %v927, %v937
    %941 = vrot.lane.b32.xlu0 %v939, 74
    %v942 = vpop.permute.xlu0 %941
    %v943 = vrot.slane %v942, 6
    %vm944 = vcmask 605184
    %v945 = vsel %vm944, %v943, %v942
    %v947 = vadd.f32 %v921, %v945
    %v948 = vmul.f32 %v213, %v235
    %v949 = vstv %s143
    %v950 = vmul.f32 %v949, %v868
    %v951 = vstv %s192
    %v952 = vmul.f32 %v951, %v869
    %v953 = vadd.f32 %v950, %v952
    %v955 = vperm.slane %v948, 0
    %v956 = vperm.slane %v948, 1
    %v957 = vrot.slane %v956, 6
    %v958 = vsel %vm252, %v955, %v957
    %959 = vrot.lane.b32.xlu0 %v958, 13
    %v960 = vpop.permute.xlu0 %959
    %v961 = vrot.slane %v960, 6
    %vm962 = vcmask 105472
    %v963 = vsel %vm962, %v961, %v960
    %v965 = vmul.f32 %v953, %v963
    %967 = vrot.lane.b32.xlu0 %v965, 64
    %v968 = vpop.permute.xlu0 %967
    %v969 = vrot.slane %v968, 6
    %vm970 = vcmask 523264
    %v971 = vsel %vm970, %v969, %v968
    %v973 = vadd.f32 %v947, %v971
    %v974 = vmul.f32 %v215, %v235
    %v975 = vstv %s144
    %v976 = vmul.f32 %v975, %v868
    %v977 = vstv %s193
    %v978 = vmul.f32 %v977, %v869
    %v979 = vadd.f32 %v976, %v978
    %v981 = vperm.slane %v974, 0
    %v982 = vperm.slane %v974, 1
    %v983 = vrot.slane %v982, 6
    %v984 = vsel %vm252, %v981, %v983
    %985 = vrot.lane.b32.xlu0 %v984, 14
    %v986 = vpop.permute.xlu0 %985
    %v987 = vrot.slane %v986, 6
    %vm988 = vcmask 113664
    %v989 = vsel %vm988, %v987, %v986
    %v991 = vmul.f32 %v979, %v989
    %993 = vrot.lane.b32.xlu0 %v991, 63
    %v994 = vpop.permute.xlu0 %993
    %v995 = vrot.slane %v994, 6
    %vm996 = vcmask 515072
    %v997 = vsel %vm996, %v995, %v994
    %v999 = vadd.f32 %v973, %v997
    %v1000 = vmul.f32 %v217, %v235
    %v1001 = vstv %s145
    %v1002 = vmul.f32 %v1001, %v868
    %v1003 = vstv %s194
    %v1004 = vmul.f32 %v1003, %v869
    %v1005 = vadd.f32 %v1002, %v1004
    %v1007 = vperm.slane %v1000, 0
    %v1008 = vperm.slane %v1000, 1
    %v1009 = vrot.slane %v1008, 6
    %v1010 = vsel %vm252, %v1007, %v1009
    %1011 = vrot.lane.b32.xlu0 %v1010, 15
    %v1012 = vpop.permute.xlu0 %1011
    %v1013 = vrot.slane %v1012, 6
    %vm1014 = vcmask 121856
    %v1015 = vsel %vm1014, %v1013, %v1012
    %v1017 = vmul.f32 %v1005, %v1015
    %1019 = vrot.lane.b32.xlu0 %v1017, 62
    %v1020 = vpop.permute.xlu0 %1019
    %v1021 = vrot.slane %v1020, 6
    %vm1022 = vcmask 506880
    %v1023 = vsel %vm1022, %v1021, %v1020
    %v1025 = vadd.f32 %v999, %v1023
    %v1026 = vmul.f32 %v219, %v235
    %v1027 = vstv %s146
    %v1028 = vmul.f32 %v1027, %v868
    %v1029 = vstv %s195
    %v1030 = vmul.f32 %v1029, %v869
    %v1031 = vadd.f32 %v1028, %v1030
    %v1033 = vperm.slane %v1026, 0
    %v1034 = vperm.slane %v1026, 1
    %v1035 = vrot.slane %v1034, 6
    %v1036 = vsel %vm252, %v1033, %v1035
    %1037 = vrot.lane.b32.xlu0 %v1036, 16
    %v1038 = vpop.permute.xlu0 %1037
    %v1039 = vrot.slane %v1038, 6
    %vm1040 = vcmask 130048
    %v1041 = vsel %vm1040, %v1039, %v1038
    %v1043 = vmul.f32 %v1031, %v1041
    %1045 = vrot.lane.b32.xlu0 %v1043, 61
    %v1046 = vpop.permute.xlu0 %1045
    %v1047 = vrot.slane %v1046, 6
    %vm1048 = vcmask 498688
    %v1049 = vsel %vm1048, %v1047, %v1046
    %v1051 = vadd.f32 %v1025, %v1049
    %v1052 = vmul.f32 %v221, %v235
    %v1053 = vstv %s147
    %v1054 = vmul.f32 %v1053, %v868
    %v1055 = vstv %s196
    %v1056 = vmul.f32 %v1055, %v869
    %v1057 = vadd.f32 %v1054, %v1056
    %v1059 = vperm.slane %v1052, 0
    %v1060 = vperm.slane %v1052, 1
    %v1061 = vrot.slane %v1060, 6
    %v1062 = vsel %vm252, %v1059, %v1061
    %1063 = vrot.lane.b32.xlu0 %v1062, 17
    %v1064 = vpop.permute.xlu0 %1063
    %v1065 = vrot.slane %v1064, 6
    %vm1066 = vcmask 138240
    %v1067 = vsel %vm1066, %v1065, %v1064
    %v1069 = vmul.f32 %v1057, %v1067
    %1071 = vrot.lane.b32.xlu0 %v1069, 60
    %v1072 = vpop.permute.xlu0 %1071
    %v1073 = vrot.slane %v1072, 6
    %vm1074 = vcmask 490496
    %v1075 = vsel %vm1074, %v1073, %v1072
    %v1077 = vadd.f32 %v1051, %v1075
    %v1078 = vmul.f32 %v223, %v235
    %v1079 = vstv %s148
    %v1080 = vmul.f32 %v1079, %v868
    %v1081 = vstv %s197
    %v1082 = vmul.f32 %v1081, %v869
    %v1083 = vadd.f32 %v1080, %v1082
    %v1085 = vperm.slane %v1078, 0
    %v1086 = vperm.slane %v1078, 1
    %v1087 = vrot.slane %v1086, 6
    %v1088 = vsel %vm252, %v1085, %v1087
    %1089 = vrot.lane.b32.xlu0 %v1088, 18
    %v1090 = vpop.permute.xlu0 %1089
    %v1091 = vrot.slane %v1090, 6
    %vm1092 = vcmask 146432
    %v1093 = vsel %vm1092, %v1091, %v1090
    %v1095 = vmul.f32 %v1083, %v1093
    %1097 = vrot.lane.b32.xlu0 %v1095, 59
    %v1098 = vpop.permute.xlu0 %1097
    %v1099 = vrot.slane %v1098, 6
    %vm1100 = vcmask 482304
    %v1101 = vsel %vm1100, %v1099, %v1098
    %v1103 = vadd.f32 %v1077, %v1101
    %v1104 = vmul.f32 %v225, %v235
    %v1105 = vstv %s149
    %v1106 = vmul.f32 %v1105, %v868
    %v1107 = vstv %s198
    %v1108 = vmul.f32 %v1107, %v869
    %v1109 = vadd.f32 %v1106, %v1108
    %v1111 = vperm.slane %v1104, 0
    %v1112 = vperm.slane %v1104, 1
    %v1113 = vrot.slane %v1112, 6
    %v1114 = vsel %vm252, %v1111, %v1113
    %1115 = vrot.lane.b32.xlu0 %v1114, 19
    %v1116 = vpop.permute.xlu0 %1115
    %v1117 = vrot.slane %v1116, 6
    %vm1118 = vcmask 154624
    %v1119 = vsel %vm1118, %v1117, %v1116
    %v1121 = vmul.f32 %v1109, %v1119
    %1123 = vrot.lane.b32.xlu0 %v1121, 58
    %v1124 = vpop.permute.xlu0 %1123
    %v1125 = vrot.slane %v1124, 6
    %vm1126 = vcmask 474112
    %v1127 = vsel %vm1126, %v1125, %v1124
    %v1129 = vadd.f32 %v1103, %v1127
    %v1130 = vmul.f32 %v213, %v237
    %v1131 = vstv %s150
    %v1132 = vmul.f32 %v1131, %v868
    %v1133 = vstv %s199
    %v1134 = vmul.f32 %v1133, %v869
    %v1135 = vadd.f32 %v1132, %v1134
    %v1137 = vperm.slane %v1130, 0
    %v1138 = vperm.slane %v1130, 1
    %v1139 = vrot.slane %v1138, 6
    %v1140 = vsel %vm252, %v1137, %v1139
    %1141 = vrot.lane.b32.xlu0 %v1140, 29
    %v1142 = vpop.permute.xlu0 %1141
    %v1143 = vrot.slane %v1142, 6
    %vm1144 = vcmask 236544
    %v1145 = vsel %vm1144, %v1143, %v1142
    %v1147 = vmul.f32 %v1135, %v1145
    %1149 = vrot.lane.b32.xlu0 %v1147, 48
    %v1150 = vpop.permute.xlu0 %1149
    %v1151 = vrot.slane %v1150, 6
    %vm1152 = vcmask 392192
    %v1153 = vsel %vm1152, %v1151, %v1150
    %v1155 = vadd.f32 %v1129, %v1153
    %v1156 = vmul.f32 %v215, %v237
    %v1157 = vstv %s151
    %v1158 = vmul.f32 %v1157, %v868
    %v1159 = vstv %s200
    %v1160 = vmul.f32 %v1159, %v869
    %v1161 = vadd.f32 %v1158, %v1160
    %v1163 = vperm.slane %v1156, 0
    %v1164 = vperm.slane %v1156, 1
    %v1165 = vrot.slane %v1164, 6
    %v1166 = vsel %vm252, %v1163, %v1165
    %1167 = vrot.lane.b32.xlu0 %v1166, 30
    %v1168 = vpop.permute.xlu0 %1167
    %v1169 = vrot.slane %v1168, 6
    %vm1170 = vcmask 244736
    %v1171 = vsel %vm1170, %v1169, %v1168
    %v1173 = vmul.f32 %v1161, %v1171
    %1175 = vrot.lane.b32.xlu0 %v1173, 47
    %v1176 = vpop.permute.xlu0 %1175
    %v1177 = vrot.slane %v1176, 6
    %vm1178 = vcmask 384000
    %v1179 = vsel %vm1178, %v1177, %v1176
    %v1181 = vadd.f32 %v1155, %v1179
    %v1182 = vmul.f32 %v217, %v237
    %v1183 = vstv %s152
    %v1184 = vmul.f32 %v1183, %v868
    %v1185 = vstv %s201
    %v1186 = vmul.f32 %v1185, %v869
    %v1187 = vadd.f32 %v1184, %v1186
    %v1189 = vperm.slane %v1182, 0
    %v1190 = vperm.slane %v1182, 1
    %v1191 = vrot.slane %v1190, 6
    %v1192 = vsel %vm252, %v1189, %v1191
    %1193 = vrot.lane.b32.xlu0 %v1192, 31
    %v1194 = vpop.permute.xlu0 %1193
    %v1195 = vrot.slane %v1194, 6
    %vm1196 = vcmask 252928
    %v1197 = vsel %vm1196, %v1195, %v1194
    %v1199 = vmul.f32 %v1187, %v1197
    %1201 = vrot.lane.b32.xlu0 %v1199, 46
    %v1202 = vpop.permute.xlu0 %1201
    %v1203 = vrot.slane %v1202, 6
    %vm1204 = vcmask 375808
    %v1205 = vsel %vm1204, %v1203, %v1202
    %v1207 = vadd.f32 %v1181, %v1205
    %v1208 = vmul.f32 %v219, %v237
    %v1209 = vstv %s153
    %v1210 = vmul.f32 %v1209, %v868
    %v1211 = vstv %s202
    %v1212 = vmul.f32 %v1211, %v869
    %v1213 = vadd.f32 %v1210, %v1212
    %v1215 = vperm.slane %v1208, 0
    %v1216 = vperm.slane %v1208, 1
    %v1217 = vrot.slane %v1216, 6
    %v1218 = vsel %vm252, %v1215, %v1217
    %1219 = vrot.lane.b32.xlu0 %v1218, 32
    %v1220 = vpop.permute.xlu0 %1219
    %v1221 = vrot.slane %v1220, 6
    %vm1222 = vcmask 261120
    %v1223 = vsel %vm1222, %v1221, %v1220
    %v1225 = vmul.f32 %v1213, %v1223
    %1227 = vrot.lane.b32.xlu0 %v1225, 45
    %v1228 = vpop.permute.xlu0 %1227
    %v1229 = vrot.slane %v1228, 6
    %vm1230 = vcmask 367616
    %v1231 = vsel %vm1230, %v1229, %v1228
    %v1233 = vadd.f32 %v1207, %v1231
    %v1234 = vmul.f32 %v221, %v237
    %v1235 = vstv %s154
    %v1236 = vmul.f32 %v1235, %v868
    %v1237 = vstv %s203
    %v1238 = vmul.f32 %v1237, %v869
    %v1239 = vadd.f32 %v1236, %v1238
    %v1241 = vperm.slane %v1234, 0
    %v1242 = vperm.slane %v1234, 1
    %v1243 = vrot.slane %v1242, 6
    %v1244 = vsel %vm252, %v1241, %v1243
    %1245 = vrot.lane.b32.xlu0 %v1244, 33
    %v1246 = vpop.permute.xlu0 %1245
    %v1247 = vrot.slane %v1246, 6
    %vm1248 = vcmask 269312
    %v1249 = vsel %vm1248, %v1247, %v1246
    %v1251 = vmul.f32 %v1239, %v1249
    %1253 = vrot.lane.b32.xlu0 %v1251, 44
    %v1254 = vpop.permute.xlu0 %1253
    %v1255 = vrot.slane %v1254, 6
    %vm1256 = vcmask 359424
    %v1257 = vsel %vm1256, %v1255, %v1254
    %v1259 = vadd.f32 %v1233, %v1257
    %v1260 = vmul.f32 %v223, %v237
    %v1261 = vstv %s155
    %v1262 = vmul.f32 %v1261, %v868
    %v1263 = vstv %s204
    %v1264 = vmul.f32 %v1263, %v869
    %v1265 = vadd.f32 %v1262, %v1264
    %v1267 = vperm.slane %v1260, 0
    %v1268 = vperm.slane %v1260, 1
    %v1269 = vrot.slane %v1268, 6
    %v1270 = vsel %vm252, %v1267, %v1269
    %1271 = vrot.lane.b32.xlu0 %v1270, 34
    %v1272 = vpop.permute.xlu0 %1271
    %v1273 = vrot.slane %v1272, 6
    %vm1274 = vcmask 277504
    %v1275 = vsel %vm1274, %v1273, %v1272
    %v1277 = vmul.f32 %v1265, %v1275
    %1279 = vrot.lane.b32.xlu0 %v1277, 43
    %v1280 = vpop.permute.xlu0 %1279
    %v1281 = vrot.slane %v1280, 6
    %vm1282 = vcmask 351232
    %v1283 = vsel %vm1282, %v1281, %v1280
    %v1285 = vadd.f32 %v1259, %v1283
    %v1286 = vmul.f32 %v225, %v237
    %v1287 = vstv %s156
    %v1288 = vmul.f32 %v1287, %v868
    %v1289 = vstv %s205
    %v1290 = vmul.f32 %v1289, %v869
    %v1291 = vadd.f32 %v1288, %v1290
    %v1293 = vperm.slane %v1286, 0
    %v1294 = vperm.slane %v1286, 1
    %v1295 = vrot.slane %v1294, 6
    %v1296 = vsel %vm252, %v1293, %v1295
    %1297 = vrot.lane.b32.xlu0 %v1296, 35
    %v1298 = vpop.permute.xlu0 %1297
    %v1299 = vrot.slane %v1298, 6
    %vm1300 = vcmask 285696
    %v1301 = vsel %vm1300, %v1299, %v1298
    %v1303 = vmul.f32 %v1291, %v1301
    %1305 = vrot.lane.b32.xlu0 %v1303, 42
    %v1306 = vpop.permute.xlu0 %1305
    %v1307 = vrot.slane %v1306, 6
    %vm1308 = vcmask 343040
    %v1309 = vsel %vm1308, %v1307, %v1306
    %v1311 = vadd.f32 %v1285, %v1309
    %v1312 = vmul.f32 %v213, %v239
    %v1313 = vstv %s157
    %v1314 = vmul.f32 %v1313, %v868
    %v1315 = vstv %s206
    %v1316 = vmul.f32 %v1315, %v869
    %v1317 = vadd.f32 %v1314, %v1316
    %v1319 = vperm.slane %v1312, 0
    %v1320 = vperm.slane %v1312, 1
    %v1321 = vrot.slane %v1320, 6
    %v1322 = vsel %vm252, %v1319, %v1321
    %1323 = vrot.lane.b32.xlu0 %v1322, 45
    %v1324 = vpop.permute.xlu0 %1323
    %v1325 = vrot.slane %v1324, 6
    %v1326 = vsel %vm1230, %v1325, %v1324
    %v1328 = vmul.f32 %v1317, %v1326
    %1330 = vrot.lane.b32.xlu0 %v1328, 32
    %v1331 = vpop.permute.xlu0 %1330
    %v1332 = vrot.slane %v1331, 6
    %v1333 = vsel %vm1222, %v1332, %v1331
    %v1335 = vadd.f32 %v1311, %v1333
    %v1336 = vmul.f32 %v215, %v239
    %v1337 = vstv %s158
    %v1338 = vmul.f32 %v1337, %v868
    %v1339 = vstv %s207
    %v1340 = vmul.f32 %v1339, %v869
    %v1341 = vadd.f32 %v1338, %v1340
    %v1343 = vperm.slane %v1336, 0
    %v1344 = vperm.slane %v1336, 1
    %v1345 = vrot.slane %v1344, 6
    %v1346 = vsel %vm252, %v1343, %v1345
    %1347 = vrot.lane.b32.xlu0 %v1346, 46
    %v1348 = vpop.permute.xlu0 %1347
    %v1349 = vrot.slane %v1348, 6
    %v1350 = vsel %vm1204, %v1349, %v1348
    %v1352 = vmul.f32 %v1341, %v1350
    %1354 = vrot.lane.b32.xlu0 %v1352, 31
    %v1355 = vpop.permute.xlu0 %1354
    %v1356 = vrot.slane %v1355, 6
    %v1357 = vsel %vm1196, %v1356, %v1355
    %v1359 = vadd.f32 %v1335, %v1357
    %v1360 = vmul.f32 %v217, %v239
    %v1361 = vstv %s159
    %v1362 = vmul.f32 %v1361, %v868
    %v1363 = vstv %s208
    %v1364 = vmul.f32 %v1363, %v869
    %v1365 = vadd.f32 %v1362, %v1364
    %v1367 = vperm.slane %v1360, 0
    %v1368 = vperm.slane %v1360, 1
    %v1369 = vrot.slane %v1368, 6
    %v1370 = vsel %vm252, %v1367, %v1369
    %1371 = vrot.lane.b32.xlu0 %v1370, 47
    %v1372 = vpop.permute.xlu0 %1371
    %v1373 = vrot.slane %v1372, 6
    %v1374 = vsel %vm1178, %v1373, %v1372
    %v1376 = vmul.f32 %v1365, %v1374
    %1378 = vrot.lane.b32.xlu0 %v1376, 30
    %v1379 = vpop.permute.xlu0 %1378
    %v1380 = vrot.slane %v1379, 6
    %v1381 = vsel %vm1170, %v1380, %v1379
    %v1383 = vadd.f32 %v1359, %v1381
    %v1384 = vmul.f32 %v219, %v239
    %v1385 = vstv %s160
    %v1386 = vmul.f32 %v1385, %v868
    %v1387 = vstv %s209
    %v1388 = vmul.f32 %v1387, %v869
    %v1389 = vadd.f32 %v1386, %v1388
    %v1391 = vperm.slane %v1384, 0
    %v1392 = vperm.slane %v1384, 1
    %v1393 = vrot.slane %v1392, 6
    %v1394 = vsel %vm252, %v1391, %v1393
    %1395 = vrot.lane.b32.xlu0 %v1394, 48
    %v1396 = vpop.permute.xlu0 %1395
    %v1397 = vrot.slane %v1396, 6
    %v1398 = vsel %vm1152, %v1397, %v1396
    %v1400 = vmul.f32 %v1389, %v1398
    %1402 = vrot.lane.b32.xlu0 %v1400, 29
    %v1403 = vpop.permute.xlu0 %1402
    %v1404 = vrot.slane %v1403, 6
    %v1405 = vsel %vm1144, %v1404, %v1403
    %v1407 = vadd.f32 %v1383, %v1405
    %v1408 = vmul.f32 %v221, %v239
    %v1409 = vstv %s161
    %v1410 = vmul.f32 %v1409, %v868
    %v1411 = vstv %s210
    %v1412 = vmul.f32 %v1411, %v869
    %v1413 = vadd.f32 %v1410, %v1412
    %v1415 = vperm.slane %v1408, 0
    %v1416 = vperm.slane %v1408, 1
    %v1417 = vrot.slane %v1416, 6
    %v1418 = vsel %vm252, %v1415, %v1417
    %1419 = vrot.lane.b32.xlu0 %v1418, 49
    %v1420 = vpop.permute.xlu0 %1419
    %v1421 = vrot.slane %v1420, 6
    %vm1422 = vcmask 400384
    %v1423 = vsel %vm1422, %v1421, %v1420
    %v1425 = vmul.f32 %v1413, %v1423
    %1427 = vrot.lane.b32.xlu0 %v1425, 28
    %v1428 = vpop.permute.xlu0 %1427
    %v1429 = vrot.slane %v1428, 6
    %vm1430 = vcmask 228352
    %v1431 = vsel %vm1430, %v1429, %v1428
    %v1433 = vadd.f32 %v1407, %v1431
    %v1434 = vmul.f32 %v223, %v239
    %v1435 = vstv %s162
    %v1436 = vmul.f32 %v1435, %v868
    %v1437 = vstv %s211
    %v1438 = vmul.f32 %v1437, %v869
    %v1439 = vadd.f32 %v1436, %v1438
    %v1441 = vperm.slane %v1434, 0
    %v1442 = vperm.slane %v1434, 1
    %v1443 = vrot.slane %v1442, 6
    %v1444 = vsel %vm252, %v1441, %v1443
    %1445 = vrot.lane.b32.xlu0 %v1444, 50
    %v1446 = vpop.permute.xlu0 %1445
    %v1447 = vrot.slane %v1446, 6
    %vm1448 = vcmask 408576
    %v1449 = vsel %vm1448, %v1447, %v1446
    %v1451 = vmul.f32 %v1439, %v1449
    %1453 = vrot.lane.b32.xlu0 %v1451, 27
    %v1454 = vpop.permute.xlu0 %1453
    %v1455 = vrot.slane %v1454, 6
    %vm1456 = vcmask 220160
    %v1457 = vsel %vm1456, %v1455, %v1454
    %v1459 = vadd.f32 %v1433, %v1457
    %v1460 = vmul.f32 %v225, %v239
    %v1461 = vstv %s163
    %v1462 = vmul.f32 %v1461, %v868
    %v1463 = vstv %s212
    %v1464 = vmul.f32 %v1463, %v869
    %v1465 = vadd.f32 %v1462, %v1464
    %v1467 = vperm.slane %v1460, 0
    %v1468 = vperm.slane %v1460, 1
    %v1469 = vrot.slane %v1468, 6
    %v1470 = vsel %vm252, %v1467, %v1469
    %1471 = vrot.lane.b32.xlu0 %v1470, 51
    %v1472 = vpop.permute.xlu0 %1471
    %v1473 = vrot.slane %v1472, 6
    %vm1474 = vcmask 416768
    %v1475 = vsel %vm1474, %v1473, %v1472
    %v1477 = vmul.f32 %v1465, %v1475
    %1479 = vrot.lane.b32.xlu0 %v1477, 26
    %v1480 = vpop.permute.xlu0 %1479
    %v1481 = vrot.slane %v1480, 6
    %vm1482 = vcmask 211968
    %v1483 = vsel %vm1482, %v1481, %v1480
    %v1485 = vadd.f32 %v1459, %v1483
    %v1486 = vxor.u32 %v1485, 2147483648
    %v1487 = vmul.f32 %v1486, 1.442695
    %v1488 = vpow.pop %v1487
    %v1489 = vadd.f32 %v1488, 1.0
    %v1490 = vrcp.pop %v1489
    %v1491 = vmul.f32 %v1489, %v1490
    %v1492 = vsub.f32 1.0, %v1491
    %v1493 = vmul.f32 %v1490, %v1492
    %v1494 = vadd.f32 %v1490, %v1493
    %vm1495 = vweird.f32 %v1489
    %vm1496 = vweird.f32 %v1490
    %vm1497 = vmor %vm1495, %vm1496
    %v1498 = vsel %vm1497, %v1490, %v1494
    %v1499 = vand.u32 2147483647, %v1489
    %vm1500 = vcmp.eq.f32.partialorder %v1499, 8.507059e+37
    %v1501 = vand.u32 %v1489, 2147483648
    %v1502 = vor.u32 1.1754944e-38, %v1501
    %v1503 = vsel %vm1500, %v1502, %v1498
    %v1504 = vmul.f32 1.0, %v1503
    %v1506 = vrot.slane %v1504, 1
    %v1507 = vrot.slane %v1504, 2
    %v1508 = vrot.slane %v1504, 3
    %vm1509 = vcmask 1040384
    %v1510 = vsel %vm1509, %v1504, %v1506
    %vm1511 = vcmask 1042434
    %v1512 = vsel %vm1511, %v1507, %v1508
    %v1513 = vsel %vm252, %v1510, %v1512
    %vm1514 = vcmask 1041409
    %v1515 = vsel %vm1514, %v1504, %v1506
    %vm1516 = vcmask 1043459
    %v1517 = vsel %vm1516, %v1507, %v1508
    %vm1518 = vcmask 1042433
    %v1519 = vsel %vm1518, %v1515, %v1517
    %v1520 = vrot.slane %v1519, 1
    %1521 = vrot.lane.b32.xlu0 %v1513, 51
    %v1522 = vpop.permute.xlu0 %1521
    %1523 = vrot.lane.b32.xlu0 %v1520, 51
    %v1524 = vpop.permute.xlu0 %1523
    %v1525 = vrot.slane %v1522, 1
    %v1526 = vrot.slane %v1524, 1
    %v1527 = vsel %vm1474, %v1522, %v1525
    %v1528 = vsel %vm1474, %v1524, %v1526
    %v1531 = vlaneseq
    %vm1532 = vcmp.ge.s32.totalorder %v1531, 0
    %vm1533 = vcmp.lt.s32.totalorder %v1531, 256
    %vm1534 = vmand %vm1532, %vm1533
    %1535 = vst.msk [vmem:[#allocation11] sm:$0x3] %vm1534, %v1527
    %1536 = vst.msk [vmem:[#allocation11 + $0x2] sm:$0x3] %vm1534, %v1528
    // Predicated region
    $region26: #{tpu_custom_call.1} parent=1 // pred_check
      _
    $region27: #{tpu_custom_call.1} parent=1 // pred_check_branch
      %1538 = sbr.rel (0) target = $region29
    $region28: #{tpu_custom_call.1} parent=1 // pred_region
      %1540 = vsyncadd [#allocation6], 0
      %s1541 = sshll.u32 [#allocation11], 4
      %s1542 = int_to_ptr.vmem [resolvable:$true] %s1541
      %s1543 = sshll.u32 %s3, 4
      %s1544 = int_to_ptr.hbm [resolvable:$true] %s1543
      %1549 = dma.vmem_to_hbm [thread:$0]  %s1542, 64, %s1544, [#allocation6], 32, 32, 2
    $region29: #{tpu_custom_call.1} parent=1 // pred_fallthru
      _
    // Predicated region
    $region30: #{tpu_custom_call.1} parent=1 // pred_check
      _
    $region31: #{tpu_custom_call.1} parent=1 // pred_check_branch
      %1551 = sbr.rel (0) target = $region33
    $region32: #{tpu_custom_call.1} parent=1 // pred_region
      %1553 = dma.done [#allocation6], 64
    $region33: #{tpu_custom_call.1} parent=1 // pred_fallthru
      _
    %1554 = vsyncpa [#allocation5], 1
    %1555 = vsyncpa [#allocation10], 1
    %1556 = vsyncpa [#allocation6], 1
    %1557 = vsyncpa [#allocation7], 1

</llo_original>
